<compile_context>
chip_gen: v7x
topology: tpu7x:2x2x1
jax: 0.10.0
libtpu: 0.0.40
codegen_flags: <defaults>
</compile_context>

<pallas_src>
import functools
import math

import jax
import jax.numpy as jnp
from jax.experimental import pallas as pl
from jax.experimental.pallas import tpu as pltpu


# ----------------------------------------------------------------------------
# Kernel
# ----------------------------------------------------------------------------
def _ghm_kernel(*refs, num_bins, label_smoothing, has_mask, synth_mask,
                compute_hist, need_msum, fold, n_valid):
    """Processes one (TM, lanes) tile of the lane-folded layout."""
    it = iter(refs)
    pred_ref = next(it)                        # (TM, L) logits, native dtype
    targ_ref = next(it)                        # (TM, L) target prob
    mask_ref = next(it) if has_mask else None  # (TM, L) mask (optional)
    lane_off_ref = next(it) if synth_mask else None   # (1, L) int32 lane->row
    inv_lab_ref = next(it)                     # (3, L)  1/label_ema, lane-tiled
    fold_ref = next(it) if compute_hist else None     # (8, TM) bf16 fold matrix
    inv_gd_ref = next(it)                      # (num_bins,) 1/GD_ema in SMEM
    loss_ref = next(it)                        # (8, L)  per-core loss partial
    hist_gd_ref = hist_lab_ref = msum_ref = None
    if compute_hist:
        hist_gd_ref = next(it)                 # (num_bins, 8, L)
        hist_lab_ref = next(it)                # (3, 8, L)
    elif need_msum:
        msum_ref = next(it)                    # (8, L)  per-core mask partial

    tm, lanes = pred_ref.shape

    @pl.when(pl.program_id(1) == 0)
    def _init():
        loss_ref[...] = jnp.zeros_like(loss_ref)
        if compute_hist:
            hist_gd_ref[...] = jnp.zeros_like(hist_gd_ref)
            hist_lab_ref[...] = jnp.zeros_like(hist_lab_ref)
        elif need_msum:
            msum_ref[...] = jnp.zeros_like(msum_ref)

    x = pred_ref[...].astype(jnp.float32)
    t = jnp.clip(targ_ref[...].astype(jnp.float32),
                 label_smoothing, 1.0 - label_smoothing)

    if has_mask:
        m = mask_ref[...].astype(jnp.float32)
    elif synth_mask:
        # Tail-validity mask built in-kernel (no extra HBM stream): element at
        # (folded_row, lane) came from original row folded_row*fold + lane//C.
        base = (pl.program_id(0) * pl.num_programs(1) + pl.program_id(1)) * tm
        rows = base + jax.lax.broadcasted_iota(jnp.int32, (tm, lanes), 0)
        orig_row = rows * fold + lane_off_ref[...]
        m = (orig_row < n_valid).astype(jnp.float32)
    else:
        m = None

    # One EUP exp feeds both the stable BCE and the sigmoid; the divide goes
    # to the EUP via pl.reciprocal.
    e = jnp.exp(-jnp.abs(x))
    inv1pe = pl.reciprocal(1.0 + e, approx=False)
    raw = jnp.maximum(x, 0.0) - x * t + jnp.log1p(e)     # BCEWithLogits 'none'
    p = jnp.where(x >= 0.0, inv1pe, e * inv1pe)          # sigmoid(x)

    # Bin indices kept as exact small-integer floats (no int casts / relayout).
    gm = jnp.clip(jnp.floor(jnp.abs(p - t) * num_bins), 0.0, num_bins - 1.0)
    ti = jnp.clip(jnp.floor(t * 3.0), 0.0, 2.0)

    def tree_fold(v):
        # (TM, L) -> (8, L) log-depth VPU reduction (TM is 8 * 2^k).
        while v.shape[0] > 8:
            h = v.shape[0] // 2
            v = v[:h, :] + v[h:, :]
        return v

    if compute_hist:
        fold_mat = fold_ref[...]                         # (8, TM) bf16

        def mxu_fold(eq):
            # Mask-weighted one-hot contribution folded on the (idle) MXU.
            src = m if m is not None else 1.0
            contrib = jnp.where(eq, src, 0.0).astype(jnp.bfloat16)
            return jax.lax.dot_general(
                fold_mat, contrib,
                dimension_numbers=(((1,), (0,)), ((), ())),
                preferred_element_type=jnp.float32)      # (8, L) f32

    # GD weights via a select chain; the per-bin compare is reused for the
    # mask-weighted GD histogram (training mode only).
    gd_w = jnp.zeros_like(x)
    for b in range(num_bins):
        eq = gm == float(b)
        gd_w = jnp.where(eq, inv_gd_ref[b], gd_w)
        if compute_hist:
            hist_gd_ref[b] = hist_gd_ref[b] + mxu_fold(eq)
    gd_w = gd_w + 0.001

    # Class weights (3 bins per class, lane-encoded table) via a select chain.
    inv_lab = inv_lab_ref[...]                           # (3, L)
    cls_w = jnp.zeros_like(x)
    for j in range(3):
        eq = ti == float(j)
        cls_w = jnp.where(eq, inv_lab[j:j + 1, :], cls_w)
        if compute_hist:
            hist_lab_ref[j] = hist_lab_ref[j] + mxu_fold(eq)
    cls_w = cls_w + 0.001

    lw = raw * jnp.sqrt(gd_w * cls_w)
    if m is not None:
        lw = lw * m
    loss_ref[...] = loss_ref[...] + tree_fold(lw)

    if (not compute_hist) and need_msum:
        msum_ref[...] = msum_ref[...] + tree_fold(m)


# ----------------------------------------------------------------------------
# Plain-JAX glue
# ----------------------------------------------------------------------------
def update_ema(ema, alpha, num_bins, hist):
    hist = hist / (jnp.sum(hist) + 1e-10) * num_bins
    ema = ema * alpha + (1.0 - alpha) * hist
    ema = ema / (jnp.sum(ema) + 1e-10) * num_bins
    return ema


def _default_num_cores():
    """2 TensorCores only on v7x / v4 / v5p; single-TC elsewhere (v5e/v6e)."""
    try:
        kind = jax.devices()[0].device_kind.lower()
    except Exception:
        return 1
    if "v7" in kind or "7x" in kind or "v4" in kind or "v5p" in kind:
        return 2
    return 1


def _choose_fold(C, max_lanes=2048):
    """Fold factor so fold*C is a multiple of 128 (full lane utilisation)."""
    if C % 128 == 0:
        return 1
    fold_dense = 128 // math.gcd(C, 128)
    if fold_dense * C <= max_lanes:
        return fold_dense
    return 1 if C >= 128 else -(-128 // C)     # fallback (may not be lane-dense)


def multilabel_ghm_loss(pred_logits, target_prob, gd_stat_ema, label_stat_ema,
                        mask=None, valid=False, num_bins=10, alpha=1.0 - 1e-6,
                        label_smoothing=0.0, row_tile=1024, num_cores=None):
    """Forward pass of MultiLabelGHMLoss. Returns (loss, new_gd_ema, new_lab_ema)."""
    assert pred_logits.shape == target_prob.shape
    C = pred_logits.shape[-1]
    if pred_logits.shape[0] == 0:
        return jnp.float32(0.0), gd_stat_ema, label_stat_ema
    # TODO(synk): runtime asserts on target range (0 <= target <= 1) from the
    # torch module are not representable on traced values; skipped.

    pred = pred_logits.reshape(-1, C)
    targ = target_prob.reshape(-1, C)
    N = pred.shape[0]
    if N == 0:
        return jnp.float32(0.0), gd_stat_ema, label_stat_ema

    if mask is not None:
        mask = mask.reshape(N, -1)
        if mask.shape[-1] == 1 and C > 1:
            mask = jnp.broadcast_to(mask, (N, C))
        if mask.dtype == jnp.bool_:
            mask = mask.astype(jnp.bfloat16)        # exact 0/1, half the bytes

    if num_cores is None:
        num_cores = _default_num_cores()

    # ---- lane-dense folding --------------------------------------------------
    fold = _choose_fold(C)
    lanes = fold * C

    # ---- tiling: (num_cores, steps) grid over folded rows, TM = 8 * 2^k -----
    cap_rows = max(8, (max(8, row_tile) * 128) // lanes)
    n_folded = -(-N // fold)
    per_core = -(-n_folded // num_cores)
    tm = 8
    while tm < per_core and tm * 2 <= cap_rows:
        tm *= 2
    steps = -(-per_core // tm)
    n_pad_rows = num_cores * steps * tm * fold
    pad = n_pad_rows - N

    has_mask = mask is not None
    synth_mask = (not has_mask) and pad > 0
    if pad > 0:
        pred = jnp.pad(pred, ((0, pad), (0, 0)))
        targ = jnp.pad(targ, ((0, pad), (0, 0)))
        if has_mask:
            mask = jnp.pad(mask, ((0, pad), (0, 0)))

    pred_f = pred.reshape(-1, lanes)
    targ_f = targ.reshape(-1, lanes)
    mask_f = mask.reshape(-1, lanes) if has_mask else None

    # tiny weight / helper tables
    inv_gd = (1.0 / gd_stat_ema).astype(jnp.float32)                 # (num_bins,)
    inv_lab = jnp.tile((1.0 / label_stat_ema).reshape(C, 3).T,
                       (1, fold)).astype(jnp.float32)                # (3, lanes)
    lane_off = (jnp.arange(lanes, dtype=jnp.int32) // C)[None, :]    # (1, lanes)
    fold_mat = (jnp.arange(tm)[None, :] % 8
                == jnp.arange(8)[:, None]).astype(jnp.bfloat16)      # (8, tm)

    compute_hist = not valid
    need_msum = (not compute_hist) and has_mask

    kernel = functools.partial(
        _ghm_kernel, num_bins=num_bins, label_smoothing=float(label_smoothing),
        has_mask=has_mask, synth_mask=synth_mask, compute_hist=compute_hist,
        need_msum=need_msum, fold=fold, n_valid=N)

    row_spec = pl.BlockSpec((tm, lanes), lambda c, i: (c * steps + i, 0))
    in_specs = [row_spec, row_spec]
    inputs = [pred_f, targ_f]
    if has_mask:
        in_specs.append(pl.BlockSpec((tm, lanes), lambda c, i: (c * steps + i, 0)))
        inputs.append(mask_f)
    if synth_mask:
        in_specs.append(pl.BlockSpec((1, lanes), lambda c, i: (0, 0)))
        inputs.append(lane_off)
    in_specs.append(pl.BlockSpec((3, lanes), lambda c, i: (0, 0)))
    inputs.append(inv_lab)
    if compute_hist:
        in_specs.append(pl.BlockSpec((8, tm), lambda c, i: (0, 0)))
        inputs.append(fold_mat)
    in_specs.append(pl.BlockSpec(memory_space=pltpu.MemorySpace.SMEM))
    inputs.append(inv_gd)

    # per-core partial accumulators (summed / unfolded in the wrapper)
    out_specs = [pl.BlockSpec((8, lanes), lambda c, i: (c, 0))]
    out_shapes = [jax.ShapeDtypeStruct((num_cores * 8, lanes), jnp.float32)]
    if compute_hist:
        out_specs += [pl.BlockSpec((num_bins, 8, lanes), lambda c, i: (c, 0, 0)),
                      pl.BlockSpec((3, 8, lanes), lambda c, i: (c, 0, 0))]
        out_shapes += [
            jax.ShapeDtypeStruct((num_cores * num_bins, 8, lanes), jnp.float32),
            jax.ShapeDtypeStruct((num_cores * 3, 8, lanes), jnp.float32)]
    elif need_msum:
        out_specs.append(pl.BlockSpec((8, lanes), lambda c, i: (c, 0)))
        out_shapes.append(jax.ShapeDtypeStruct((num_cores * 8, lanes), jnp.float32))

    # VMEM budget: double-buffered streams + live temporaries + accumulators,
    # ~2x real footprint (much tighter than before) and capped under v7x scoped VMEM.
    n_streams = 3 if has_mask else 2
    tile_b = tm * lanes * 4
    est = (n_streams * 2 * tile_b + 24 * tile_b
           + 2 * (num_bins + 5) * 8 * lanes * 4 + 8 * tm * 2 + (4 << 20))
    vmem_limit = int(min(32 * 1024 * 1024, max(8 * 1024 * 1024, est)))

    outs = pl.pallas_call(
        kernel,
        grid=(num_cores, steps),
        in_specs=in_specs,
        out_specs=tuple(out_specs),
        out_shape=tuple(out_shapes),
        compiler_params=pltpu.CompilerParams(
            dimension_semantics=("parallel", "arbitrary"),
            vmem_limit_bytes=vmem_limit),
    )(*inputs)

    if compute_hist:
        loss_part, hgd, hlab = outs
        hist_gd_lane = hgd.reshape(num_cores, num_bins, 8, lanes).sum(axis=(0, 2))
        hist_lab_lane = hlab.reshape(num_cores, 3, 8, lanes).sum(axis=(0, 2))
        hist_gd = hist_gd_lane.reshape(num_bins, fold, C).sum(axis=(1, 2))      # (num_bins,)
        hist_lab = hist_lab_lane.reshape(3, fold, C).sum(axis=1).T.reshape(-1)  # (3C,)
        mask_sum = jnp.sum(hist_gd)       # every masked element lands in one GD bin
        loss = jnp.sum(loss_part) / mask_sum
        new_gd = update_ema(gd_stat_ema, alpha, num_bins, hist_gd)
        new_lab = update_ema(label_stat_ema, alpha, C * 3, hist_lab)
        return loss, new_gd, new_lab
    else:
        if need_msum:
            loss_part, msum_part = outs
            denom = jnp.sum(msum_part)
        else:
            loss_part, = outs
            denom = jnp.float32(float(N * C))
        loss = jnp.sum(loss_part) / denom
        return loss, gd_stat_ema, label_stat_ema


# ----------------------------------------------------------------------------
# Pure-JAX reference (mirrors the PyTorch forward) for verification
# ----------------------------------------------------------------------------
def _ref_forward(pred, targ, mask, gd_ema, lab_ema, num_bins, label_smoothing):
    C = pred.shape[-1]
    pred = pred.reshape(-1, C).astype(jnp.float32)
    targ = jnp.clip(targ.reshape(-1, C).astype(jnp.float32),
                    label_smoothing, 1.0 - label_smoothing)
    mask = mask.reshape(pred.shape[0], -1).astype(jnp.float32)
    raw = jnp.maximum(pred, 0.0) - pred * targ + jnp.log1p(jnp.exp(-jnp.abs(pred)))
    p = jax.nn.sigmoid(pred)
    gm_idx = jnp.clip(jnp.floor(jnp.abs(p - targ) * num_bins),
                      0, num_bins - 1).astype(jnp.int32)
    gd_w = 1.0 / gd_ema[gm_idx] + 0.001
    t_idx = (jnp.clip(jnp.floor(targ * 3.0), 0, 2).astype(jnp.int32)
             + 3 * jnp.arange(C)[None, :])
    cls_w = 1.0 / lab_ema[t_idx] + 0.001
    lw = raw * jnp.sqrt(gd_w * cls_w) * mask
    loss = jnp.sum(lw) / jnp.sum(mask)
    hist_gd = jnp.zeros(num_bins, jnp.float32).at[gm_idx.flatten()].add(mask.flatten())
    hist_lab = jnp.zeros(C * 3, jnp.float32).at[t_idx.flatten()].add(mask.flatten())
    return loss, hist_gd, hist_lab


if __name__ == "__main__":
    NUM_CLASSES = 4
    NUM_BINS = 10
    ALPHA = 1.0 - 1e-6
    LABEL_SMOOTHING = 0.0

    key = jax.random.PRNGKey(0)
    k1, k2, k3, k4, k5, k6, k7 = jax.random.split(key, 7)

    gd_ema = jnp.ones((NUM_BINS,), jnp.float32)
    lab_ema = jnp.ones((NUM_CLASSES * 3,), jnp.float32)

    # --- 1) training mode, explicit mask, tail padding ------------------------
    B, S, C = 2, 8, NUM_CLASSES                      # N = 16 rows after flatten
    pred = jax.random.normal(k1, (B, S, C), jnp.float32)
    targ = jax.random.uniform(k2, (B, S, C), jnp.float32)
    mask = (jax.random.uniform(k3, (B, S, C)) > 0.25).astype(jnp.float32)

    loss, new_gd, new_lab = multilabel_ghm_loss(
        pred, targ, gd_ema, lab_ema, mask=mask, valid=False,
        num_bins=NUM_BINS, alpha=ALPHA, label_smoothing=LABEL_SMOOTHING)
    jax.block_until_ready((loss, new_gd, new_lab))

    ref_loss, ref_hgd, ref_hlab = _ref_forward(
        pred, targ, mask, gd_ema, lab_ema, NUM_BINS, LABEL_SMOOTHING)
    ref_gd = update_ema(gd_ema, ALPHA, NUM_BINS, ref_hgd)
    ref_lab = update_ema(lab_ema, ALPHA, NUM_CLASSES * 3, ref_hlab)
    assert jnp.allclose(loss, ref_loss, rtol=1e-5, atol=1e-5), (loss, ref_loss)
    assert jnp.allclose(new_gd, ref_gd, rtol=1e-5, atol=1e-6)
    assert jnp.allclose(new_lab, ref_lab, rtol=1e-5, atol=1e-6)

    # --- 2) training mode, mask=None, no tail padding -------------------------
    B2, S2 = 2, 256                                   # N = 512 -> no pad, no mask
    pred2 = jax.random.normal(k4, (B2, S2, C), jnp.float32)
    targ2 = jax.random.uniform(k5, (B2, S2, C), jnp.float32)

    loss_nm, gd_nm, lab_nm = multilabel_ghm_loss(
        pred2, targ2, gd_ema, lab_ema, mask=None, valid=False,
        num_bins=NUM_BINS, alpha=ALPHA, label_smoothing=LABEL_SMOOTHING)
    jax.block_until_ready((loss_nm, gd_nm, lab_nm))

    ones2 = jnp.ones((B2, S2, C), jnp.float32)
    r_loss, r_hgd, r_hlab = _ref_forward(
        pred2, targ2, ones2, gd_ema, lab_ema, NUM_BINS, LABEL_SMOOTHING)
    assert jnp.allclose(loss_nm, r_loss, rtol=1e-5, atol=1e-5), (loss_nm, r_loss)
    assert jnp.allclose(gd_nm, update_ema(gd_ema, ALPHA, NUM_BINS, r_hgd),
                        rtol=1e-5, atol=1e-6)
    assert jnp.allclose(lab_nm, update_ema(lab_ema, ALPHA, NUM_CLASSES * 3, r_hlab),
                        rtol=1e-5, atol=1e-6)

    # --- 3) eval mode (valid=True), mask: loss-only kernel + msum path --------
    loss_v, gd_v, lab_v = multilabel_ghm_loss(
        pred, targ, gd_ema, lab_ema, mask=mask, valid=True,
        num_bins=NUM_BINS, alpha=ALPHA, label_smoothing=LABEL_SMOOTHING)
    jax.block_until_ready(loss_v)
    assert jnp.allclose(loss_v, ref_loss, rtol=1e-5, atol=1e-5), (loss_v, ref_loss)
    assert jnp.allclose(gd_v, gd_ema) and jnp.allclose(lab_v, lab_ema)

    # --- 4) training mode, mask=None WITH tail padding (in-kernel synth mask) -
    B3, S3 = 2, 300                                   # N = 600 -> pad > 0
    pred3 = jax.random.normal(k6, (B3, S3, C), jnp.float32)
    targ3 = jax.random.uniform(k7, (B3, S3, C), jnp.float32)
    loss3, gd3, lab3 = multilabel_ghm_loss(
        pred3, targ3, gd_ema, lab_ema, mask=None, valid=False,
        num_bins=NUM_BINS, alpha=ALPHA, label_smoothing=LABEL_SMOOTHING)
    jax.block_until_ready((loss3, gd3, lab3))
    ones3 = jnp.ones((B3, S3, C), jnp.float32)
    r3_loss, r3_hgd, r3_hlab = _ref_forward(
        pred3, targ3, ones3, gd_ema, lab_ema, NUM_BINS, LABEL_SMOOTHING)
    assert jnp.allclose(loss3, r3_loss, rtol=1e-5, atol=1e-5), (loss3, r3_loss)
    assert jnp.allclose(gd3, update_ema(gd_ema, ALPHA, NUM_BINS, r3_hgd),
                        rtol=1e-5, atol=1e-6)
    assert jnp.allclose(lab3, update_ema(lab_ema, ALPHA, NUM_CLASSES * 3, r3_hlab),
                        rtol=1e-5, atol=1e-6)

    # --- 5) eval mode, mask=None with padding: loss-only, static denominator --
    loss5, gd5, lab5 = multilabel_ghm_loss(
        pred3, targ3, gd_ema, lab_ema, mask=None, valid=True,
        num_bins=NUM_BINS, alpha=ALPHA, label_smoothing=LABEL_SMOOTHING)
    jax.block_until_ready(loss5)
    assert jnp.allclose(loss5, r3_loss, rtol=1e-5, atol=1e-5), (loss5, r3_loss)
    assert jnp.allclose(gd5, gd_ema) and jnp.allclose(lab5, lab_ema)

    print("KERNEL_OK")
</pallas_src>

<mosaic_0001>
module attributes {stable_mosaic.version = 11 : i64} {
  func.func @_ghm_kernel(%arg0: i32, %arg1: i32, %arg2: memref<8x128xf32, #tpu.memory_space<vmem>>, %arg3: memref<8x128xf32, #tpu.memory_space<vmem>>, %arg4: memref<8x128xf32, #tpu.memory_space<vmem>>, %arg5: memref<3x128xf32, #tpu.memory_space<vmem>>, %arg6: memref<8x8xbf16, #tpu.memory_space<vmem>>, %arg7: memref<10xf32, #tpu.memory_space<smem>>, %arg8: memref<8x128xf32, #tpu.memory_space<vmem>>, %arg9: memref<10x8x128xf32, #tpu.memory_space<vmem>>, %arg10: memref<3x8x128xf32, #tpu.memory_space<vmem>>) attributes {dimension_semantics = [#tpu.dimension_semantics<parallel>, #tpu.dimension_semantics<arbitrary>], iteration_bounds = array<i64: 1, 1>, scalar_prefetch = 0 : i64, scratch_operands = 0 : i64, tpu.core_type = #tpu.core_type<tc>, window_params = [{transform_indices = @transform_0, window_bounds = array<i64: 8, 128>}, {transform_indices = @transform_1, window_bounds = array<i64: 8, 128>}, {transform_indices = @transform_2, window_bounds = array<i64: 8, 128>}, {pipeline_mode = #tpu.pipeline_mode<synchronous>, transform_indices = @transform_3, window_bounds = array<i64: 3, 128>}, {pipeline_mode = #tpu.pipeline_mode<synchronous>, transform_indices = @transform_4, window_bounds = array<i64: 8, 8>}, {transform_indices = @transform_5, window_bounds = array<i64: 10>}, {transform_indices = @transform_6, window_bounds = array<i64: 8, 128>}, {transform_indices = @transform_7, window_bounds = array<i64: 10, 8, 128>}, {transform_indices = @transform_8, window_bounds = array<i64: 3, 8, 128>}]} {
    %c0_i32 = arith.constant 0 : i32
    %0 = arith.cmpi eq, %arg1, %c0_i32 : i32
    %1 = arith.extui %0 : i1 to i32
    %c0_i32_0 = arith.constant 0 : i32
    %2 = arith.cmpi ne, %1, %c0_i32_0 : i32
    scf.if %2 {
      %cst_147 = arith.constant 0.000000e+00 : f32
      %256 = vector.broadcast %cst_147 : f32 to vector<8x128xf32>
      %c0_148 = arith.constant 0 : index
      %c0_149 = arith.constant 0 : index
      %257 = vector.load %arg8[%c0_148, %c0_149] : memref<8x128xf32, #tpu.memory_space<vmem>>, vector<8x128xf32>
      tpu.vector_store %arg8[%c0_148, %c0_149], %256 {strides = array<i32>} : memref<8x128xf32, #tpu.memory_space<vmem>>, vector<8x128xf32>,
      %cst_150 = arith.constant 0.000000e+00 : f32
      %258 = vector.broadcast %cst_150 : f32 to vector<10x8x128xf32>
      %c0_151 = arith.constant 0 : index
      %c0_152 = arith.constant 0 : index
      %c0_153 = arith.constant 0 : index
      %259 = vector.load %arg9[%c0_151, %c0_152, %c0_153] : memref<10x8x128xf32, #tpu.memory_space<vmem>>, vector<10x8x128xf32>
      tpu.vector_store %arg9[%c0_151, %c0_152, %c0_153], %258 {strides = array<i32>} : memref<10x8x128xf32, #tpu.memory_space<vmem>>, vector<10x8x128xf32>,
      %cst_154 = arith.constant 0.000000e+00 : f32
      %260 = vector.broadcast %cst_154 : f32 to vector<3x8x128xf32>
      %c0_155 = arith.constant 0 : index
      %c0_156 = arith.constant 0 : index
      %c0_157 = arith.constant 0 : index
      %261 = vector.load %arg10[%c0_155, %c0_156, %c0_157] : memref<3x8x128xf32, #tpu.memory_space<vmem>>, vector<3x8x128xf32>
      tpu.vector_store %arg10[%c0_155, %c0_156, %c0_157], %260 {strides = array<i32>} : memref<3x8x128xf32, #tpu.memory_space<vmem>>, vector<3x8x128xf32>,
    } else {
    }
    %c0 = arith.constant 0 : index
    %c0_1 = arith.constant 0 : index
    %3 = vector.load %arg2[%c0, %c0_1] : memref<8x128xf32, #tpu.memory_space<vmem>>, vector<8x128xf32>
    %c0_2 = arith.constant 0 : index
    %c0_3 = arith.constant 0 : index
    %4 = vector.load %arg3[%c0_2, %c0_3] : memref<8x128xf32, #tpu.memory_space<vmem>>, vector<8x128xf32>
    %cst = arith.constant 0.000000e+00 : f32
    %cst_4 = arith.constant 1.000000e+00 : f32
    %5 = vector.broadcast %cst : f32 to vector<8x128xf32>
    %6 = arith.maximumf %5, %4 : vector<8x128xf32>
    %7 = vector.broadcast %cst_4 : f32 to vector<8x128xf32>
    %8 = arith.minimumf %7, %6 : vector<8x128xf32>
    %c0_5 = arith.constant 0 : index
    %c0_6 = arith.constant 0 : index
    %9 = vector.load %arg4[%c0_5, %c0_6] : memref<8x128xf32, #tpu.memory_space<vmem>>, vector<8x128xf32>
    %10 = math.absf %3 : vector<8x128xf32>
    %cst_7 = arith.constant 0.000000e+00 : f32
    %11 = vector.broadcast %cst_7 : f32 to vector<8x128xf32>
    %12 = arith.subf %11, %10 : vector<8x128xf32>
    %13 = math.exp %12 : vector<8x128xf32>
    %cst_8 = arith.constant 1.000000e+00 : f32
    %14 = vector.broadcast %cst_8 : f32 to vector<8x128xf32>
    %15 = arith.addf %14, %13 : vector<8x128xf32>
    %16 = tpu.reciprocal %15 : vector<8x128xf32> -> vector<8x128xf32>
    %cst_9 = arith.constant 0.000000e+00 : f32
    %17 = vector.broadcast %cst_9 : f32 to vector<8x128xf32>
    %18 = arith.maximumf %3, %17 : vector<8x128xf32>
    %19 = arith.mulf %3, %8 : vector<8x128xf32>
    %20 = arith.subf %18, %19 : vector<8x128xf32>
    %21 = math.log1p %13 : vector<8x128xf32>
    %22 = arith.addf %20, %21 : vector<8x128xf32>
    %cst_10 = arith.constant 0.000000e+00 : f32
    %23 = vector.broadcast %cst_10 : f32 to vector<8x128xf32>
    %24 = arith.cmpf oge, %3, %23 : vector<8x128xf32>
    %25 = arith.mulf %13, %16 : vector<8x128xf32>
    %26 = arith.select %24, %16, %25 : vector<8x128xi1>, vector<8x128xf32>
    %27 = arith.subf %26, %8 : vector<8x128xf32>
    %28 = math.absf %27 : vector<8x128xf32>
    %cst_11 = arith.constant 1.000000e+01 : f32
    %29 = vector.broadcast %cst_11 : f32 to vector<8x128xf32>
    %30 = arith.mulf %28, %29 : vector<8x128xf32>
    %31 = math.floor %30 : vector<8x128xf32>
    %cst_12 = arith.constant 0.000000e+00 : f32
    %cst_13 = arith.constant 9.000000e+00 : f32
    %32 = vector.broadcast %cst_12 : f32 to vector<8x128xf32>
    %33 = arith.maximumf %32, %31 : vector<8x128xf32>
    %34 = vector.broadcast %cst_13 : f32 to vector<8x128xf32>
    %35 = arith.minimumf %34, %33 : vector<8x128xf32>
    %cst_14 = arith.constant 3.000000e+00 : f32
    %36 = vector.broadcast %cst_14 : f32 to vector<8x128xf32>
    %37 = arith.mulf %8, %36 : vector<8x128xf32>
    %38 = math.floor %37 : vector<8x128xf32>
    %cst_15 = arith.constant 0.000000e+00 : f32
    %cst_16 = arith.constant 2.000000e+00 : f32
    %39 = vector.broadcast %cst_15 : f32 to vector<8x128xf32>
    %40 = arith.maximumf %39, %38 : vector<8x128xf32>
    %41 = vector.broadcast %cst_16 : f32 to vector<8x128xf32>
    %42 = arith.minimumf %41, %40 : vector<8x128xf32>
    %c0_17 = arith.constant 0 : index
    %c0_18 = arith.constant 0 : index
    %43 = vector.load %arg6[%c0_17, %c0_18] : memref<8x8xbf16, #tpu.memory_space<vmem>>, vector<8x8xbf16>
    %cst_19 = arith.constant 0.000000e+00 : f32
    %44 = vector.broadcast %cst_19 : f32 to vector<8x128xf32>
    %cst_20 = arith.constant 0.000000e+00 : f32
    %45 = vector.broadcast %cst_20 : f32 to vector<8x128xf32>
    %46 = arith.cmpf oeq, %35, %45 : vector<8x128xf32>
    %c0_21 = arith.constant 0 : index
    %47 = memref.load %arg7[%c0_21] : memref<10xf32, #tpu.memory_space<smem>>
    %48 = vector.broadcast %47 : f32 to vector<8x128xf32>
    %49 = arith.select %46, %48, %44 : vector<8x128xi1>, vector<8x128xf32>
    %c0_22 = arith.constant 0 : index
    %c0_23 = arith.constant 0 : index
    %c0_24 = arith.constant 0 : index
    %50 = vector.load %arg9[%c0_22, %c0_23, %c0_24] : memref<10x8x128xf32, #tpu.memory_space<vmem>>, vector<1x8x128xf32>
    %51 = vector.shape_cast %50 : vector<1x8x128xf32> to vector<8x128xf32>
    %cst_25 = arith.constant 0.000000e+00 : f32
    %52 = vector.broadcast %cst_25 : f32 to vector<8x128xf32>
    %53 = arith.select %46, %9, %52 : vector<8x128xi1>, vector<8x128xf32>
    %54 = arith.truncf %53 : vector<8x128xf32> to vector<8x128xbf16>
    %cst_26 = arith.constant dense<0.000000e+00> : vector<8x128xf32>
    %55 = tpu.matmul %43, %54, %cst_26 {dimension_numbers = #tpu.dot_dimension_numbers<[1], [0], [0], [1], [0, 0, 1, 1], [], []>} : vector<8x8xbf16>, vector<8x128xbf16>, vector<8x128xf32> -> vector<8x128xf32>
    %56 = arith.addf %51, %55 : vector<8x128xf32>
    %c0_27 = arith.constant 0 : index
    %c0_28 = arith.constant 0 : index
    %c0_29 = arith.constant 0 : index
    %57 = vector.load %arg9[%c0_27, %c0_28, %c0_29] : memref<10x8x128xf32, #tpu.memory_space<vmem>>, vector<1x8x128xf32>
    %58 = vector.shape_cast %57 : vector<1x8x128xf32> to vector<8x128xf32>
    %59 = vector.shape_cast %56 : vector<8x128xf32> to vector<1x8x128xf32>
    tpu.vector_store %arg9[%c0_27, %c0_28, %c0_29], %59 {strides = array<i32>} : memref<10x8x128xf32, #tpu.memory_space<vmem>>, vector<1x8x128xf32>,
    %cst_30 = arith.constant 1.000000e+00 : f32
    %60 = vector.broadcast %cst_30 : f32 to vector<8x128xf32>
    %61 = arith.cmpf oeq, %35, %60 : vector<8x128xf32>
    %c1 = arith.constant 1 : index
    %62 = memref.load %arg7[%c1] : memref<10xf32, #tpu.memory_space<smem>>
    %63 = vector.broadcast %62 : f32 to vector<8x128xf32>
    %64 = arith.select %61, %63, %49 : vector<8x128xi1>, vector<8x128xf32>
    %c1_31 = arith.constant 1 : index
    %c0_32 = arith.constant 0 : index
    %c0_33 = arith.constant 0 : index
    %65 = vector.load %arg9[%c1_31, %c0_32, %c0_33] : memref<10x8x128xf32, #tpu.memory_space<vmem>>, vector<1x8x128xf32>
    %66 = vector.shape_cast %65 : vector<1x8x128xf32> to vector<8x128xf32>
    %cst_34 = arith.constant 0.000000e+00 : f32
    %67 = vector.broadcast %cst_34 : f32 to vector<8x128xf32>
    %68 = arith.select %61, %9, %67 : vector<8x128xi1>, vector<8x128xf32>
    %69 = arith.truncf %68 : vector<8x128xf32> to vector<8x128xbf16>
    %cst_35 = arith.constant dense<0.000000e+00> : vector<8x128xf32>
    %70 = tpu.matmul %43, %69, %cst_35 {dimension_numbers = #tpu.dot_dimension_numbers<[1], [0], [0], [1], [0, 0, 1, 1], [], []>} : vector<8x8xbf16>, vector<8x128xbf16>, vector<8x128xf32> -> vector<8x128xf32>
    %71 = arith.addf %66, %70 : vector<8x128xf32>
    %c1_36 = arith.constant 1 : index
    %c0_37 = arith.constant 0 : index
    %c0_38 = arith.constant 0 : index
    %72 = vector.load %arg9[%c1_36, %c0_37, %c0_38] : memref<10x8x128xf32, #tpu.memory_space<vmem>>, vector<1x8x128xf32>
    %73 = vector.shape_cast %72 : vector<1x8x128xf32> to vector<8x128xf32>
    %74 = vector.shape_cast %71 : vector<8x128xf32> to vector<1x8x128xf32>
    tpu.vector_store %arg9[%c1_36, %c0_37, %c0_38], %74 {strides = array<i32>} : memref<10x8x128xf32, #tpu.memory_space<vmem>>, vector<1x8x128xf32>,
    %cst_39 = arith.constant 2.000000e+00 : f32
    %75 = vector.broadcast %cst_39 : f32 to vector<8x128xf32>
    %76 = arith.cmpf oeq, %35, %75 : vector<8x128xf32>
    %c2 = arith.constant 2 : index
    %77 = memref.load %arg7[%c2] : memref<10xf32, #tpu.memory_space<smem>>
    %78 = vector.broadcast %77 : f32 to vector<8x128xf32>
    %79 = arith.select %76, %78, %64 : vector<8x128xi1>, vector<8x128xf32>
    %c2_40 = arith.constant 2 : index
    %c0_41 = arith.constant 0 : index
    %c0_42 = arith.constant 0 : index
    %80 = vector.load %arg9[%c2_40, %c0_41, %c0_42] : memref<10x8x128xf32, #tpu.memory_space<vmem>>, vector<1x8x128xf32>
    %81 = vector.shape_cast %80 : vector<1x8x128xf32> to vector<8x128xf32>
    %cst_43 = arith.constant 0.000000e+00 : f32
    %82 = vector.broadcast %cst_43 : f32 to vector<8x128xf32>
    %83 = arith.select %76, %9, %82 : vector<8x128xi1>, vector<8x128xf32>
    %84 = arith.truncf %83 : vector<8x128xf32> to vector<8x128xbf16>
    %cst_44 = arith.constant dense<0.000000e+00> : vector<8x128xf32>
    %85 = tpu.matmul %43, %84, %cst_44 {dimension_numbers = #tpu.dot_dimension_numbers<[1], [0], [0], [1], [0, 0, 1, 1], [], []>} : vector<8x8xbf16>, vector<8x128xbf16>, vector<8x128xf32> -> vector<8x128xf32>
    %86 = arith.addf %81, %85 : vector<8x128xf32>
    %c2_45 = arith.constant 2 : index
    %c0_46 = arith.constant 0 : index
    %c0_47 = arith.constant 0 : index
    %87 = vector.load %arg9[%c2_45, %c0_46, %c0_47] : memref<10x8x128xf32, #tpu.memory_space<vmem>>, vector<1x8x128xf32>
    %88 = vector.shape_cast %87 : vector<1x8x128xf32> to vector<8x128xf32>
    %89 = vector.shape_cast %86 : vector<8x128xf32> to vector<1x8x128xf32>
    tpu.vector_store %arg9[%c2_45, %c0_46, %c0_47], %89 {strides = array<i32>} : memref<10x8x128xf32, #tpu.memory_space<vmem>>, vector<1x8x128xf32>,
    %cst_48 = arith.constant 3.000000e+00 : f32
    %90 = vector.broadcast %cst_48 : f32 to vector<8x128xf32>
    %91 = arith.cmpf oeq, %35, %90 : vector<8x128xf32>
    %c3 = arith.constant 3 : index
    %92 = memref.load %arg7[%c3] : memref<10xf32, #tpu.memory_space<smem>>
    %93 = vector.broadcast %92 : f32 to vector<8x128xf32>
    %94 = arith.select %91, %93, %79 : vector<8x128xi1>, vector<8x128xf32>
    %c3_49 = arith.constant 3 : index
    %c0_50 = arith.constant 0 : index
    %c0_51 = arith.constant 0 : index
    %95 = vector.load %arg9[%c3_49, %c0_50, %c0_51] : memref<10x8x128xf32, #tpu.memory_space<vmem>>, vector<1x8x128xf32>
    %96 = vector.shape_cast %95 : vector<1x8x128xf32> to vector<8x128xf32>
    %cst_52 = arith.constant 0.000000e+00 : f32
    %97 = vector.broadcast %cst_52 : f32 to vector<8x128xf32>
    %98 = arith.select %91, %9, %97 : vector<8x128xi1>, vector<8x128xf32>
    %99 = arith.truncf %98 : vector<8x128xf32> to vector<8x128xbf16>
    %cst_53 = arith.constant dense<0.000000e+00> : vector<8x128xf32>
    %100 = tpu.matmul %43, %99, %cst_53 {dimension_numbers = #tpu.dot_dimension_numbers<[1], [0], [0], [1], [0, 0, 1, 1], [], []>} : vector<8x8xbf16>, vector<8x128xbf16>, vector<8x128xf32> -> vector<8x128xf32>
    %101 = arith.addf %96, %100 : vector<8x128xf32>
    %c3_54 = arith.constant 3 : index
    %c0_55 = arith.constant 0 : index
    %c0_56 = arith.constant 0 : index
    %102 = vector.load %arg9[%c3_54, %c0_55, %c0_56] : memref<10x8x128xf32, #tpu.memory_space<vmem>>, vector<1x8x128xf32>
    %103 = vector.shape_cast %102 : vector<1x8x128xf32> to vector<8x128xf32>
    %104 = vector.shape_cast %101 : vector<8x128xf32> to vector<1x8x128xf32>
    tpu.vector_store %arg9[%c3_54, %c0_55, %c0_56], %104 {strides = array<i32>} : memref<10x8x128xf32, #tpu.memory_space<vmem>>, vector<1x8x128xf32>,
    %cst_57 = arith.constant 4.000000e+00 : f32
    %105 = vector.broadcast %cst_57 : f32 to vector<8x128xf32>
    %106 = arith.cmpf oeq, %35, %105 : vector<8x128xf32>
    %c4 = arith.constant 4 : index
    %107 = memref.load %arg7[%c4] : memref<10xf32, #tpu.memory_space<smem>>
    %108 = vector.broadcast %107 : f32 to vector<8x128xf32>
    %109 = arith.select %106, %108, %94 : vector<8x128xi1>, vector<8x128xf32>
    %c4_58 = arith.constant 4 : index
    %c0_59 = arith.constant 0 : index
    %c0_60 = arith.constant 0 : index
    %110 = vector.load %arg9[%c4_58, %c0_59, %c0_60] : memref<10x8x128xf32, #tpu.memory_space<vmem>>, vector<1x8x128xf32>
    %111 = vector.shape_cast %110 : vector<1x8x128xf32> to vector<8x128xf32>
    %cst_61 = arith.constant 0.000000e+00 : f32
    %112 = vector.broadcast %cst_61 : f32 to vector<8x128xf32>
    %113 = arith.select %106, %9, %112 : vector<8x128xi1>, vector<8x128xf32>
    %114 = arith.truncf %113 : vector<8x128xf32> to vector<8x128xbf16>
    %cst_62 = arith.constant dense<0.000000e+00> : vector<8x128xf32>
    %115 = tpu.matmul %43, %114, %cst_62 {dimension_numbers = #tpu.dot_dimension_numbers<[1], [0], [0], [1], [0, 0, 1, 1], [], []>} : vector<8x8xbf16>, vector<8x128xbf16>, vector<8x128xf32> -> vector<8x128xf32>
    %116 = arith.addf %111, %115 : vector<8x128xf32>
    %c4_63 = arith.constant 4 : index
    %c0_64 = arith.constant 0 : index
    %c0_65 = arith.constant 0 : index
    %117 = vector.load %arg9[%c4_63, %c0_64, %c0_65] : memref<10x8x128xf32, #tpu.memory_space<vmem>>, vector<1x8x128xf32>
    %118 = vector.shape_cast %117 : vector<1x8x128xf32> to vector<8x128xf32>
    %119 = vector.shape_cast %116 : vector<8x128xf32> to vector<1x8x128xf32>
    tpu.vector_store %arg9[%c4_63, %c0_64, %c0_65], %119 {strides = array<i32>} : memref<10x8x128xf32, #tpu.memory_space<vmem>>, vector<1x8x128xf32>,
    %cst_66 = arith.constant 5.000000e+00 : f32
    %120 = vector.broadcast %cst_66 : f32 to vector<8x128xf32>
    %121 = arith.cmpf oeq, %35, %120 : vector<8x128xf32>
    %c5 = arith.constant 5 : index
    %122 = memref.load %arg7[%c5] : memref<10xf32, #tpu.memory_space<smem>>
    %123 = vector.broadcast %122 : f32 to vector<8x128xf32>
    %124 = arith.select %121, %123, %109 : vector<8x128xi1>, vector<8x128xf32>
    %c5_67 = arith.constant 5 : index
    %c0_68 = arith.constant 0 : index
    %c0_69 = arith.constant 0 : index
    %125 = vector.load %arg9[%c5_67, %c0_68, %c0_69] : memref<10x8x128xf32, #tpu.memory_space<vmem>>, vector<1x8x128xf32>
    %126 = vector.shape_cast %125 : vector<1x8x128xf32> to vector<8x128xf32>
    %cst_70 = arith.constant 0.000000e+00 : f32
    %127 = vector.broadcast %cst_70 : f32 to vector<8x128xf32>
    %128 = arith.select %121, %9, %127 : vector<8x128xi1>, vector<8x128xf32>
    %129 = arith.truncf %128 : vector<8x128xf32> to vector<8x128xbf16>
    %cst_71 = arith.constant dense<0.000000e+00> : vector<8x128xf32>
    %130 = tpu.matmul %43, %129, %cst_71 {dimension_numbers = #tpu.dot_dimension_numbers<[1], [0], [0], [1], [0, 0, 1, 1], [], []>} : vector<8x8xbf16>, vector<8x128xbf16>, vector<8x128xf32> -> vector<8x128xf32>
    %131 = arith.addf %126, %130 : vector<8x128xf32>
    %c5_72 = arith.constant 5 : index
    %c0_73 = arith.constant 0 : index
    %c0_74 = arith.constant 0 : index
    %132 = vector.load %arg9[%c5_72, %c0_73, %c0_74] : memref<10x8x128xf32, #tpu.memory_space<vmem>>, vector<1x8x128xf32>
    %133 = vector.shape_cast %132 : vector<1x8x128xf32> to vector<8x128xf32>
    %134 = vector.shape_cast %131 : vector<8x128xf32> to vector<1x8x128xf32>
    tpu.vector_store %arg9[%c5_72, %c0_73, %c0_74], %134 {strides = array<i32>} : memref<10x8x128xf32, #tpu.memory_space<vmem>>, vector<1x8x128xf32>,
    %cst_75 = arith.constant 6.000000e+00 : f32
    %135 = vector.broadcast %cst_75 : f32 to vector<8x128xf32>
    %136 = arith.cmpf oeq, %35, %135 : vector<8x128xf32>
    %c6 = arith.constant 6 : index
    %137 = memref.load %arg7[%c6] : memref<10xf32, #tpu.memory_space<smem>>
    %138 = vector.broadcast %137 : f32 to vector<8x128xf32>
    %139 = arith.select %136, %138, %124 : vector<8x128xi1>, vector<8x128xf32>
    %c6_76 = arith.constant 6 : index
    %c0_77 = arith.constant 0 : index
    %c0_78 = arith.constant 0 : index
    %140 = vector.load %arg9[%c6_76, %c0_77, %c0_78] : memref<10x8x128xf32, #tpu.memory_space<vmem>>, vector<1x8x128xf32>
    %141 = vector.shape_cast %140 : vector<1x8x128xf32> to vector<8x128xf32>
    %cst_79 = arith.constant 0.000000e+00 : f32
    %142 = vector.broadcast %cst_79 : f32 to vector<8x128xf32>
    %143 = arith.select %136, %9, %142 : vector<8x128xi1>, vector<8x128xf32>
    %144 = arith.truncf %143 : vector<8x128xf32> to vector<8x128xbf16>
    %cst_80 = arith.constant dense<0.000000e+00> : vector<8x128xf32>
    %145 = tpu.matmul %43, %144, %cst_80 {dimension_numbers = #tpu.dot_dimension_numbers<[1], [0], [0], [1], [0, 0, 1, 1], [], []>} : vector<8x8xbf16>, vector<8x128xbf16>, vector<8x128xf32> -> vector<8x128xf32>
    %146 = arith.addf %141, %145 : vector<8x128xf32>
    %c6_81 = arith.constant 6 : index
    %c0_82 = arith.constant 0 : index
    %c0_83 = arith.constant 0 : index
    %147 = vector.load %arg9[%c6_81, %c0_82, %c0_83] : memref<10x8x128xf32, #tpu.memory_space<vmem>>, vector<1x8x128xf32>
    %148 = vector.shape_cast %147 : vector<1x8x128xf32> to vector<8x128xf32>
    %149 = vector.shape_cast %146 : vector<8x128xf32> to vector<1x8x128xf32>
    tpu.vector_store %arg9[%c6_81, %c0_82, %c0_83], %149 {strides = array<i32>} : memref<10x8x128xf32, #tpu.memory_space<vmem>>, vector<1x8x128xf32>,
    %cst_84 = arith.constant 7.000000e+00 : f32
    %150 = vector.broadcast %cst_84 : f32 to vector<8x128xf32>
    %151 = arith.cmpf oeq, %35, %150 : vector<8x128xf32>
    %c7 = arith.constant 7 : index
    %152 = memref.load %arg7[%c7] : memref<10xf32, #tpu.memory_space<smem>>
    %153 = vector.broadcast %152 : f32 to vector<8x128xf32>
    %154 = arith.select %151, %153, %139 : vector<8x128xi1>, vector<8x128xf32>
    %c7_85 = arith.constant 7 : index
    %c0_86 = arith.constant 0 : index
    %c0_87 = arith.constant 0 : index
    %155 = vector.load %arg9[%c7_85, %c0_86, %c0_87] : memref<10x8x128xf32, #tpu.memory_space<vmem>>, vector<1x8x128xf32>
    %156 = vector.shape_cast %155 : vector<1x8x128xf32> to vector<8x128xf32>
    %cst_88 = arith.constant 0.000000e+00 : f32
    %157 = vector.broadcast %cst_88 : f32 to vector<8x128xf32>
    %158 = arith.select %151, %9, %157 : vector<8x128xi1>, vector<8x128xf32>
    %159 = arith.truncf %158 : vector<8x128xf32> to vector<8x128xbf16>
    %cst_89 = arith.constant dense<0.000000e+00> : vector<8x128xf32>
    %160 = tpu.matmul %43, %159, %cst_89 {dimension_numbers = #tpu.dot_dimension_numbers<[1], [0], [0], [1], [0, 0, 1, 1], [], []>} : vector<8x8xbf16>, vector<8x128xbf16>, vector<8x128xf32> -> vector<8x128xf32>
    %161 = arith.addf %156, %160 : vector<8x128xf32>
    %c7_90 = arith.constant 7 : index
    %c0_91 = arith.constant 0 : index
    %c0_92 = arith.constant 0 : index
    %162 = vector.load %arg9[%c7_90, %c0_91, %c0_92] : memref<10x8x128xf32, #tpu.memory_space<vmem>>, vector<1x8x128xf32>
    %163 = vector.shape_cast %162 : vector<1x8x128xf32> to vector<8x128xf32>
    %164 = vector.shape_cast %161 : vector<8x128xf32> to vector<1x8x128xf32>
    tpu.vector_store %arg9[%c7_90, %c0_91, %c0_92], %164 {strides = array<i32>} : memref<10x8x128xf32, #tpu.memory_space<vmem>>, vector<1x8x128xf32>,
    %cst_93 = arith.constant 8.000000e+00 : f32
    %165 = vector.broadcast %cst_93 : f32 to vector<8x128xf32>
    %166 = arith.cmpf oeq, %35, %165 : vector<8x128xf32>
    %c8 = arith.constant 8 : index
    %167 = memref.load %arg7[%c8] : memref<10xf32, #tpu.memory_space<smem>>
    %168 = vector.broadcast %167 : f32 to vector<8x128xf32>
    %169 = arith.select %166, %168, %154 : vector<8x128xi1>, vector<8x128xf32>
    %c8_94 = arith.constant 8 : index
    %c0_95 = arith.constant 0 : index
    %c0_96 = arith.constant 0 : index
    %170 = vector.load %arg9[%c8_94, %c0_95, %c0_96] : memref<10x8x128xf32, #tpu.memory_space<vmem>>, vector<1x8x128xf32>
    %171 = vector.shape_cast %170 : vector<1x8x128xf32> to vector<8x128xf32>
    %cst_97 = arith.constant 0.000000e+00 : f32
    %172 = vector.broadcast %cst_97 : f32 to vector<8x128xf32>
    %173 = arith.select %166, %9, %172 : vector<8x128xi1>, vector<8x128xf32>
    %174 = arith.truncf %173 : vector<8x128xf32> to vector<8x128xbf16>
    %cst_98 = arith.constant dense<0.000000e+00> : vector<8x128xf32>
    %175 = tpu.matmul %43, %174, %cst_98 {dimension_numbers = #tpu.dot_dimension_numbers<[1], [0], [0], [1], [0, 0, 1, 1], [], []>} : vector<8x8xbf16>, vector<8x128xbf16>, vector<8x128xf32> -> vector<8x128xf32>
    %176 = arith.addf %171, %175 : vector<8x128xf32>
    %c8_99 = arith.constant 8 : index
    %c0_100 = arith.constant 0 : index
    %c0_101 = arith.constant 0 : index
    %177 = vector.load %arg9[%c8_99, %c0_100, %c0_101] : memref<10x8x128xf32, #tpu.memory_space<vmem>>, vector<1x8x128xf32>
    %178 = vector.shape_cast %177 : vector<1x8x128xf32> to vector<8x128xf32>
    %179 = vector.shape_cast %176 : vector<8x128xf32> to vector<1x8x128xf32>
    tpu.vector_store %arg9[%c8_99, %c0_100, %c0_101], %179 {strides = array<i32>} : memref<10x8x128xf32, #tpu.memory_space<vmem>>, vector<1x8x128xf32>,
    %cst_102 = arith.constant 9.000000e+00 : f32
    %180 = vector.broadcast %cst_102 : f32 to vector<8x128xf32>
    %181 = arith.cmpf oeq, %35, %180 : vector<8x128xf32>
    %c9 = arith.constant 9 : index
    %182 = memref.load %arg7[%c9] : memref<10xf32, #tpu.memory_space<smem>>
    %183 = vector.broadcast %182 : f32 to vector<8x128xf32>
    %184 = arith.select %181, %183, %169 : vector<8x128xi1>, vector<8x128xf32>
    %c9_103 = arith.constant 9 : index
    %c0_104 = arith.constant 0 : index
    %c0_105 = arith.constant 0 : index
    %185 = vector.load %arg9[%c9_103, %c0_104, %c0_105] : memref<10x8x128xf32, #tpu.memory_space<vmem>>, vector<1x8x128xf32>
    %186 = vector.shape_cast %185 : vector<1x8x128xf32> to vector<8x128xf32>
    %cst_106 = arith.constant 0.000000e+00 : f32
    %187 = vector.broadcast %cst_106 : f32 to vector<8x128xf32>
    %188 = arith.select %181, %9, %187 : vector<8x128xi1>, vector<8x128xf32>
    %189 = arith.truncf %188 : vector<8x128xf32> to vector<8x128xbf16>
    %cst_107 = arith.constant dense<0.000000e+00> : vector<8x128xf32>
    %190 = tpu.matmul %43, %189, %cst_107 {dimension_numbers = #tpu.dot_dimension_numbers<[1], [0], [0], [1], [0, 0, 1, 1], [], []>} : vector<8x8xbf16>, vector<8x128xbf16>, vector<8x128xf32> -> vector<8x128xf32>
    %191 = arith.addf %186, %190 : vector<8x128xf32>
    %c9_108 = arith.constant 9 : index
    %c0_109 = arith.constant 0 : index
    %c0_110 = arith.constant 0 : index
    %192 = vector.load %arg9[%c9_108, %c0_109, %c0_110] : memref<10x8x128xf32, #tpu.memory_space<vmem>>, vector<1x8x128xf32>
    %193 = vector.shape_cast %192 : vector<1x8x128xf32> to vector<8x128xf32>
    %194 = vector.shape_cast %191 : vector<8x128xf32> to vector<1x8x128xf32>
    tpu.vector_store %arg9[%c9_108, %c0_109, %c0_110], %194 {strides = array<i32>} : memref<10x8x128xf32, #tpu.memory_space<vmem>>, vector<1x8x128xf32>,
    %cst_111 = arith.constant 1.000000e-03 : f32
    %195 = vector.broadcast %cst_111 : f32 to vector<8x128xf32>
    %196 = arith.addf %184, %195 : vector<8x128xf32>
    %c0_112 = arith.constant 0 : index
    %c0_113 = arith.constant 0 : index
    %197 = vector.load %arg5[%c0_112, %c0_113] : memref<3x128xf32, #tpu.memory_space<vmem>>, vector<3x128xf32>
    %cst_114 = arith.constant 0.000000e+00 : f32
    %198 = vector.broadcast %cst_114 : f32 to vector<8x128xf32>
    %cst_115 = arith.constant 0.000000e+00 : f32
    %199 = vector.broadcast %cst_115 : f32 to vector<8x128xf32>
    %200 = arith.cmpf oeq, %42, %199 : vector<8x128xf32>
    %201 = vector.extract_strided_slice %197 {offsets = [0, 0], sizes = [1, 128], strides = [1, 1]} : vector<3x128xf32> to vector<1x128xf32>
    %202 = vector.shape_cast %201 : vector<1x128xf32> to vector<1x128xf32>
    %203 = vector.broadcast %202 : vector<1x128xf32> to vector<8x128xf32>
    %204 = arith.select %200, %203, %198 : vector<8x128xi1>, vector<8x128xf32>
    %c0_116 = arith.constant 0 : index
    %c0_117 = arith.constant 0 : index
    %c0_118 = arith.constant 0 : index
    %205 = vector.load %arg10[%c0_116, %c0_117, %c0_118] : memref<3x8x128xf32, #tpu.memory_space<vmem>>, vector<1x8x128xf32>
    %206 = vector.shape_cast %205 : vector<1x8x128xf32> to vector<8x128xf32>
    %cst_119 = arith.constant 0.000000e+00 : f32
    %207 = vector.broadcast %cst_119 : f32 to vector<8x128xf32>
    %208 = arith.select %200, %9, %207 : vector<8x128xi1>, vector<8x128xf32>
    %209 = arith.truncf %208 : vector<8x128xf32> to vector<8x128xbf16>
    %cst_120 = arith.constant dense<0.000000e+00> : vector<8x128xf32>
    %210 = tpu.matmul %43, %209, %cst_120 {dimension_numbers = #tpu.dot_dimension_numbers<[1], [0], [0], [1], [0, 0, 1, 1], [], []>} : vector<8x8xbf16>, vector<8x128xbf16>, vector<8x128xf32> -> vector<8x128xf32>
    %211 = arith.addf %206, %210 : vector<8x128xf32>
    %c0_121 = arith.constant 0 : index
    %c0_122 = arith.constant 0 : index
    %c0_123 = arith.constant 0 : index
    %212 = vector.load %arg10[%c0_121, %c0_122, %c0_123] : memref<3x8x128xf32, #tpu.memory_space<vmem>>, vector<1x8x128xf32>
    %213 = vector.shape_cast %212 : vector<1x8x128xf32> to vector<8x128xf32>
    %214 = vector.shape_cast %211 : vector<8x128xf32> to vector<1x8x128xf32>
    tpu.vector_store %arg10[%c0_121, %c0_122, %c0_123], %214 {strides = array<i32>} : memref<3x8x128xf32, #tpu.memory_space<vmem>>, vector<1x8x128xf32>,
    %cst_124 = arith.constant 1.000000e+00 : f32
    %215 = vector.broadcast %cst_124 : f32 to vector<8x128xf32>
    %216 = arith.cmpf oeq, %42, %215 : vector<8x128xf32>
    %217 = vector.extract_strided_slice %197 {offsets = [1, 0], sizes = [1, 128], strides = [1, 1]} : vector<3x128xf32> to vector<1x128xf32>
    %218 = vector.shape_cast %217 : vector<1x128xf32> to vector<1x128xf32>
    %219 = vector.broadcast %218 : vector<1x128xf32> to vector<8x128xf32>
    %220 = arith.select %216, %219, %204 : vector<8x128xi1>, vector<8x128xf32>
    %c1_125 = arith.constant 1 : index
    %c0_126 = arith.constant 0 : index
    %c0_127 = arith.constant 0 : index
    %221 = vector.load %arg10[%c1_125, %c0_126, %c0_127] : memref<3x8x128xf32, #tpu.memory_space<vmem>>, vector<1x8x128xf32>
    %222 = vector.shape_cast %221 : vector<1x8x128xf32> to vector<8x128xf32>
    %cst_128 = arith.constant 0.000000e+00 : f32
    %223 = vector.broadcast %cst_128 : f32 to vector<8x128xf32>
    %224 = arith.select %216, %9, %223 : vector<8x128xi1>, vector<8x128xf32>
    %225 = arith.truncf %224 : vector<8x128xf32> to vector<8x128xbf16>
    %cst_129 = arith.constant dense<0.000000e+00> : vector<8x128xf32>
    %226 = tpu.matmul %43, %225, %cst_129 {dimension_numbers = #tpu.dot_dimension_numbers<[1], [0], [0], [1], [0, 0, 1, 1], [], []>} : vector<8x8xbf16>, vector<8x128xbf16>, vector<8x128xf32> -> vector<8x128xf32>
    %227 = arith.addf %222, %226 : vector<8x128xf32>
    %c1_130 = arith.constant 1 : index
    %c0_131 = arith.constant 0 : index
    %c0_132 = arith.constant 0 : index
    %228 = vector.load %arg10[%c1_130, %c0_131, %c0_132] : memref<3x8x128xf32, #tpu.memory_space<vmem>>, vector<1x8x128xf32>
    %229 = vector.shape_cast %228 : vector<1x8x128xf32> to vector<8x128xf32>
    %230 = vector.shape_cast %227 : vector<8x128xf32> to vector<1x8x128xf32>
    tpu.vector_store %arg10[%c1_130, %c0_131, %c0_132], %230 {strides = array<i32>} : memref<3x8x128xf32, #tpu.memory_space<vmem>>, vector<1x8x128xf32>,
    %cst_133 = arith.constant 2.000000e+00 : f32
    %231 = vector.broadcast %cst_133 : f32 to vector<8x128xf32>
    %232 = arith.cmpf oeq, %42, %231 : vector<8x128xf32>
    %233 = vector.extract_strided_slice %197 {offsets = [2, 0], sizes = [1, 128], strides = [1, 1]} : vector<3x128xf32> to vector<1x128xf32>
    %234 = vector.shape_cast %233 : vector<1x128xf32> to vector<1x128xf32>
    %235 = vector.broadcast %234 : vector<1x128xf32> to vector<8x128xf32>
    %236 = arith.select %232, %235, %220 : vector<8x128xi1>, vector<8x128xf32>
    %c2_134 = arith.constant 2 : index
    %c0_135 = arith.constant 0 : index
    %c0_136 = arith.constant 0 : index
    %237 = vector.load %arg10[%c2_134, %c0_135, %c0_136] : memref<3x8x128xf32, #tpu.memory_space<vmem>>, vector<1x8x128xf32>
    %238 = vector.shape_cast %237 : vector<1x8x128xf32> to vector<8x128xf32>
    %cst_137 = arith.constant 0.000000e+00 : f32
    %239 = vector.broadcast %cst_137 : f32 to vector<8x128xf32>
    %240 = arith.select %232, %9, %239 : vector<8x128xi1>, vector<8x128xf32>
    %241 = arith.truncf %240 : vector<8x128xf32> to vector<8x128xbf16>
    %cst_138 = arith.constant dense<0.000000e+00> : vector<8x128xf32>
    %242 = tpu.matmul %43, %241, %cst_138 {dimension_numbers = #tpu.dot_dimension_numbers<[1], [0], [0], [1], [0, 0, 1, 1], [], []>} : vector<8x8xbf16>, vector<8x128xbf16>, vector<8x128xf32> -> vector<8x128xf32>
    %243 = arith.addf %238, %242 : vector<8x128xf32>
    %c2_139 = arith.constant 2 : index
    %c0_140 = arith.constant 0 : index
    %c0_141 = arith.constant 0 : index
    %244 = vector.load %arg10[%c2_139, %c0_140, %c0_141] : memref<3x8x128xf32, #tpu.memory_space<vmem>>, vector<1x8x128xf32>
    %245 = vector.shape_cast %244 : vector<1x8x128xf32> to vector<8x128xf32>
    %246 = vector.shape_cast %243 : vector<8x128xf32> to vector<1x8x128xf32>
    tpu.vector_store %arg10[%c2_139, %c0_140, %c0_141], %246 {strides = array<i32>} : memref<3x8x128xf32, #tpu.memory_space<vmem>>, vector<1x8x128xf32>,
    %cst_142 = arith.constant 1.000000e-03 : f32
    %247 = vector.broadcast %cst_142 : f32 to vector<8x128xf32>
    %248 = arith.addf %236, %247 : vector<8x128xf32>
    %249 = arith.mulf %196, %248 : vector<8x128xf32>
    %250 = math.sqrt %249 : vector<8x128xf32>
    %251 = arith.mulf %22, %250 : vector<8x128xf32>
    %252 = arith.mulf %251, %9 : vector<8x128xf32>
    %c0_143 = arith.constant 0 : index
    %c0_144 = arith.constant 0 : index
    %253 = vector.load %arg8[%c0_143, %c0_144] : memref<8x128xf32, #tpu.memory_space<vmem>>, vector<8x128xf32>
    %254 = arith.addf %253, %252 : vector<8x128xf32>
    %c0_145 = arith.constant 0 : index
    %c0_146 = arith.constant 0 : index
    %255 = vector.load %arg8[%c0_145, %c0_146] : memref<8x128xf32, #tpu.memory_space<vmem>>, vector<8x128xf32>
    tpu.vector_store %arg8[%c0_145, %c0_146], %254 {strides = array<i32>} : memref<8x128xf32, #tpu.memory_space<vmem>>, vector<8x128xf32>,
    return
  }
  func.func @transform_0(%arg0: i32, %arg1: i32) -> (i32, i32) {
    %c1_i32 = arith.constant 1 : i32
    %0 = arith.muli %arg0, %c1_i32 : i32
    %1 = arith.addi %0, %arg1 : i32
    %c0_i32 = arith.constant 0 : i32
    %c0_i32_0 = arith.constant 0 : i32
    return %1, %c0_i32 : i32, i32
  }
  func.func @transform_1(%arg0: i32, %arg1: i32) -> (i32, i32) {
    %c1_i32 = arith.constant 1 : i32
    %0 = arith.muli %arg0, %c1_i32 : i32
    %1 = arith.addi %0, %arg1 : i32
    %c0_i32 = arith.constant 0 : i32
    %c0_i32_0 = arith.constant 0 : i32
    return %1, %c0_i32 : i32, i32
  }
  func.func @transform_2(%arg0: i32, %arg1: i32) -> (i32, i32) {
    %c1_i32 = arith.constant 1 : i32
    %0 = arith.muli %arg0, %c1_i32 : i32
    %1 = arith.addi %0, %arg1 : i32
    %c0_i32 = arith.constant 0 : i32
    %c0_i32_0 = arith.constant 0 : i32
    return %1, %c0_i32 : i32, i32
  }
  func.func @transform_3(%arg0: i32, %arg1: i32) -> (i32, i32) {
    %c0_i32 = arith.constant 0 : i32
    %c0_i32_0 = arith.constant 0 : i32
    %c0_i32_1 = arith.constant 0 : i32
    return %c0_i32, %c0_i32_0 : i32, i32
  }
  func.func @transform_4(%arg0: i32, %arg1: i32) -> (i32, i32) {
    %c0_i32 = arith.constant 0 : i32
    %c0_i32_0 = arith.constant 0 : i32
    %c0_i32_1 = arith.constant 0 : i32
    return %c0_i32, %c0_i32_0 : i32, i32
  }
  func.func @transform_5(%arg0: i32, %arg1: i32) -> i32 {
    %c0_i32 = arith.constant 0 : i32
    %c0_i32_0 = arith.constant 0 : i32
    return %c0_i32 : i32
  }
  func.func @transform_6(%arg0: i32, %arg1: i32) -> (i32, i32) {
    %c0_i32 = arith.constant 0 : i32
    %c0_i32_0 = arith.constant 0 : i32
    return %arg0, %c0_i32 : i32, i32
  }
  func.func @transform_7(%arg0: i32, %arg1: i32) -> (i32, i32, i32) {
    %c0_i32 = arith.constant 0 : i32
    %c0_i32_0 = arith.constant 0 : i32
    %c0_i32_1 = arith.constant 0 : i32
    return %arg0, %c0_i32, %c0_i32_0 : i32, i32, i32
  }
  func.func @transform_8(%arg0: i32, %arg1: i32) -> (i32, i32, i32) {
    %c0_i32 = arith.constant 0 : i32
    %c0_i32_0 = arith.constant 0 : i32
    %c0_i32_1 = arith.constant 0 : i32
    return %arg0, %c0_i32, %c0_i32_0 : i32, i32, i32
  }
}

</mosaic_0001>

<llo_original>
// kernel: tpu_custom_call.1
$region0: #{tpu_custom_call.1}
  #allocation0 [shape = 'u32[]', space=smem, size = 0x4, offset = 0x4, fixed_abs, tag = 'smem constant byte address 0x4 - core index']
  #allocation1 [shape = 'u32[144,128]{1,0:T(1,128)}', space=vmem, size = 0x12000, scoped, tag = 'internal scratch']
  %s0 = inlined_call_operand.hbm [shape: f32[8,128], index: 0, kind: input, shape index: {}]
  %s1 = inlined_call_operand.hbm [shape: f32[8,128], index: 1, kind: input, shape index: {}]
  %s2 = inlined_call_operand.hbm [shape: f32[8,128], index: 2, kind: input, shape index: {}]
  %s3 = inlined_call_operand.vmem [shape: f32[3,128], index: 3, kind: input, shape index: {}]
  %s4 = inlined_call_operand.vmem [shape: bf16[8,8], index: 4, kind: input, shape index: {}]
  %s5 = inlined_call_operand.vmem [shape: f32[10], index: 5, kind: input, shape index: {}]
  %s6 = inlined_call_operand.hbm [shape: f32[8,128], index: 6, kind: output, shape index: {0}]
  %s7 = inlined_call_operand.hbm [shape: f32[10,8,128], index: 7, kind: output, shape index: {1}]
  %s8 = inlined_call_operand.hbm [shape: f32[3,8,128], index: 8, kind: output, shape index: {2}]
  %9 = xla_tuple %s6, %s7, %s8
  %s10 = sld [smem:[#allocation0]]
  $region70: #{tpu_custom_call.1} parent=0
    _
  %s12 = ssub.s32 1, %s10
  %s13 = scalar_select 0, %s12, %s10
  $region1: #{tpu_custom_call.1} parent=0
    #allocation2 [shape = 'u8[4096]{0}', space=vmem, size = 0x1000, scoped, tag = 'input window, operand 0, single buffered']
    #allocation3 [shape = 's32[1]{0}', space=sflag, size = 0x4, scoped, tag = 'scoped memory for tpu_custom_call.1']
    #allocation4 [shape = 's32[1]{0}', space=sflag, size = 0x4, scoped, tag = 'scoped memory for tpu_custom_call.1']
    #allocation5 [shape = 's32[1]{0}', space=sflag, size = 0x4, scoped, tag = 'scoped memory for tpu_custom_call.1']
    #allocation6 [shape = 'u8[4096]{0}', space=vmem, size = 0x1000, scoped, tag = 'input window, operand 1, single buffered']
    #allocation7 [shape = 's32[1]{0}', space=sflag, size = 0x4, scoped, tag = 'scoped memory for tpu_custom_call.1']
    #allocation8 [shape = 'u8[4096]{0}', space=vmem, size = 0x1000, scoped, tag = 'input window, operand 2, single buffered']
    #allocation9 [shape = 'u8[512]{0}', space=smem, size = 0x200, scoped, tag = 'input window, operand 5, single buffered']
    #allocation10 [shape = 'u8[4096]{0}', space=vmem, size = 0x1000, scoped, tag = 'output window, operand 0, single buffered']
    #allocation11 [shape = 'u8[40960]{0}', space=vmem, size = 0xa000, scoped, tag = 'output window, operand 1, single buffered']
    #allocation12 [shape = 's32[1]{0}', space=sflag, size = 0x4, scoped, tag = 'scoped memory for tpu_custom_call.1']
    #allocation13 [shape = 'u8[12288]{0}', space=vmem, size = 0x3000, scoped, tag = 'output window, operand 2, single buffered']
    %14 = vsyncpa [#allocation3], 0
    %15 = vsyncpa [#allocation7], 0
    %16 = vsyncpa [#allocation5], 0
    %17 = vsyncpa [#allocation4], 0
    %18 = vsyncpa [#allocation12], 0
    // Predicated region
    $region2: #{tpu_custom_call.1} parent=1 // pred_check
      _
    $region3: #{tpu_custom_call.1} parent=1 // pred_check_branch
      %20 = sbr.rel (0) target = $region5
    $region4: #{tpu_custom_call.1} parent=1 // pred_region
      %s21 = sadd.s32 0, 0
      %s23 = ssub.s32 128, 128
      %24 = vsyncadd [#allocation3], %s23
      %s25 = smul.addr %s21, 128
      %s26 = scalar_lea.hbm %s0, %s25
      %s28 = sshll.u32 [#allocation2], 4
      %s29 = int_to_ptr.vmem [resolvable:$true] %s28
      %31 = dma.hbm_to_vmem [thread:$0]  %s26, 128, %s29, [#allocation3]
    $region5: #{tpu_custom_call.1} parent=1 // pred_fallthru
      _
    // Predicated region
    $region6: #{tpu_custom_call.1} parent=1 // pred_check
      _
    $region7: #{tpu_custom_call.1} parent=1 // pred_check_branch
      %33 = sbr.rel (0) target = $region9
    $region8: #{tpu_custom_call.1} parent=1 // pred_region
      %s34 = sadd.s32 0, 0
      %s36 = ssub.s32 128, 128
      %37 = vsyncadd [#allocation7], %s36
      %s38 = smul.addr %s34, 128
      %s39 = scalar_lea.hbm %s1, %s38
      %s41 = sshll.u32 [#allocation6], 4
      %s42 = int_to_ptr.vmem [resolvable:$true] %s41
      %44 = dma.hbm_to_vmem [thread:$0]  %s39, 128, %s42, [#allocation7]
    $region9: #{tpu_custom_call.1} parent=1 // pred_fallthru
      _
    // Predicated region
    $region10: #{tpu_custom_call.1} parent=1 // pred_check
      _
    $region11: #{tpu_custom_call.1} parent=1 // pred_check_branch
      %46 = sbr.rel (0) target = $region13
    $region12: #{tpu_custom_call.1} parent=1 // pred_region
      %s47 = sadd.s32 0, 0
      %s49 = ssub.s32 128, 128
      %50 = vsyncadd [#allocation7], %s49
      %s51 = smul.addr %s47, 128
      %s52 = scalar_lea.hbm %s2, %s51
      %s54 = sshll.u32 [#allocation8], 4
      %s55 = int_to_ptr.vmem [resolvable:$true] %s54
      %57 = dma.hbm_to_vmem [thread:$0]  %s52, 128, %s55, [#allocation7]
    $region13: #{tpu_custom_call.1} parent=1 // pred_fallthru
      _
    // Predicated region
    $region14: #{tpu_custom_call.1} parent=1 // pred_check
      _
    $region15: #{tpu_custom_call.1} parent=1 // pred_check_branch
      %59 = sbr.rel (0) target = $region17
    $region16: #{tpu_custom_call.1} parent=1 // pred_region
      _
    $region17: #{tpu_custom_call.1} parent=1 // pred_fallthru
      _
    // Predicated region
    $region18: #{tpu_custom_call.1} parent=1 // pred_check
      _
    $region19: #{tpu_custom_call.1} parent=1 // pred_check_branch
      %61 = sbr.rel (0) target = $region21
    $region20: #{tpu_custom_call.1} parent=1 // pred_region
      _
    $region21: #{tpu_custom_call.1} parent=1 // pred_fallthru
      _
    // Predicated region
    $region22: #{tpu_custom_call.1} parent=1 // pred_check
      _
    $region23: #{tpu_custom_call.1} parent=1 // pred_check_branch
      %63 = sbr.rel (0) target = $region25
    $region24: #{tpu_custom_call.1} parent=1 // pred_region
      %s65 = ssub.s32 16, 16
      %66 = vsyncadd [#allocation5], %s65
      %s68 = sshll.u32 %s5, 4
      %s69 = int_to_ptr.vmem [resolvable:$true] %s68
      %71 = dma.vmem_to_smem %s69, 16, [#allocation9], [#allocation5]
    $region25: #{tpu_custom_call.1} parent=1 // pred_fallthru
      _
    // Predicated region
    $region26: #{tpu_custom_call.1} parent=1 // pred_check
      _
    $region27: #{tpu_custom_call.1} parent=1 // pred_check_branch
      %73 = sbr.rel (0) target = $region29
    $region28: #{tpu_custom_call.1} parent=1 // pred_region
      %74 = dma.done [#allocation3], 128
    $region29: #{tpu_custom_call.1} parent=1 // pred_fallthru
      _
    // Predicated region
    $region30: #{tpu_custom_call.1} parent=1 // pred_check
      _
    $region31: #{tpu_custom_call.1} parent=1 // pred_check_branch
      %76 = sbr.rel (0) target = $region33
    $region32: #{tpu_custom_call.1} parent=1 // pred_region
      %77 = dma.done [#allocation7], 128
    $region33: #{tpu_custom_call.1} parent=1 // pred_fallthru
      _
    // Predicated region
    $region34: #{tpu_custom_call.1} parent=1 // pred_check
      _
    $region35: #{tpu_custom_call.1} parent=1 // pred_check_branch
      %79 = sbr.rel (0) target = $region37
    $region36: #{tpu_custom_call.1} parent=1 // pred_region
      %80 = dma.done [#allocation7], 128
    $region37: #{tpu_custom_call.1} parent=1 // pred_fallthru
      _
    // Predicated region
    $region38: #{tpu_custom_call.1} parent=1 // pred_check
      _
    $region39: #{tpu_custom_call.1} parent=1 // pred_check_branch
      %82 = sbr.rel (0) target = $region41
    $region40: #{tpu_custom_call.1} parent=1 // pred_region
      %83 = dma.done [#allocation5], 16
    $region41: #{tpu_custom_call.1} parent=1 // pred_fallthru
      _
    %84 = sfence
    %s85 = sadd.s32 0, 0
    %s86 = sadd.s32 0, 0
    %s87 = sadd.s32 0, 0
    %p89 = scmp.eq.s32.totalorder 0, 0
    // Predicated region
    $region42: #{tpu_custom_call.1} parent=1 // pred_check
      %p90 = pneg %p89
    $region43: #{tpu_custom_call.1} parent=1 // pred_check_branch
      %92 = sbr.rel (%p90) target = $region45
    $region44: #{tpu_custom_call.1} parent=1 // pred_region
      %93 = vst [vmem:[#allocation10] sm:$0xff] 0.0
      %94 = vst [vmem:[#allocation11] sm:$0xff] 0.0
      %95 = vst [vmem:[#allocation11 + $0x8] sm:$0xff] 0.0
      %96 = vst [vmem:[#allocation11 + $0x10] sm:$0xff] 0.0
      %97 = vst [vmem:[#allocation11 + $0x18] sm:$0xff] 0.0
      %98 = vst [vmem:[#allocation11 + $0x20] sm:$0xff] 0.0
      %99 = vst [vmem:[#allocation11 + $0x28] sm:$0xff] 0.0
      %100 = vst [vmem:[#allocation11 + $0x30] sm:$0xff] 0.0
      %101 = vst [vmem:[#allocation11 + $0x38] sm:$0xff] 0.0
      %102 = vst [vmem:[#allocation11 + $0x40] sm:$0xff] 0.0
      %103 = vst [vmem:[#allocation11 + $0x48] sm:$0xff] 0.0
      %104 = vst [vmem:[#allocation13] sm:$0xff] 0.0
      %105 = vst [vmem:[#allocation13 + $0x8] sm:$0xff] 0.0
      %106 = vst [vmem:[#allocation13 + $0x10] sm:$0xff] 0.0
    $region45: #{tpu_custom_call.1} parent=1 // pred_fallthru
      _
    %v107 = vld [vmem:[#allocation2] sm:$0xff]
    %v108 = vld [vmem:[#allocation6] sm:$0xff]
    %v109 = vmax.f32 %v108, 0.0
    %v110 = vmin.f32 %v109, 1.0
    %v111 = vld [vmem:[#allocation8] sm:$0xff]
    %v112 = vand.u32 2147483647, %v107
    %v113 = vsub.f32 0.0, %v112
    %v114 = vmul.f32 %v113, 1.442695
    %v115 = vpow.pop %v114
    %v116 = vadd.f32 %v115, 1.0
    %v117 = vrcp.pop %v116
    %v118 = vmax.f32 %v107, 0.0
    %v119 = vmul.f32 %v107, %v110
    %v120 = vsub.f32 %v118, %v119
    %v121 = vadd.f32 %v115, 1.0
    %v122 = vlog2.pop %v121
    %v123 = vmul.f32 %v122, 0.6931472
    %v124 = vmul.f32 -0.5, %v115
    %v125 = vadd.f32 %v124, 1.0
    %v126 = vmul.f32 %v125, %v115
    %v127 = vand.u32 2147483647, %v115
    %vm128 = vcmp.lt.f32.partialorder %v127, 0.0004427343
    %v129 = vsel %vm128, %v126, %v123
    %v130 = vadd.f32 %v120, %v129
    %vm131 = vcmp.ge.f32.partialorder %v107, 0.0
    %v132 = vmul.f32 %v115, %v117
    %v133 = vsel %vm131, %v117, %v132
    %v134 = vsub.f32 %v133, %v110
    %v135 = vand.u32 2147483647, %v134
    %v136 = vmul.f32 %v135, 10.0
    %v137 = vfloor.f32 %v136
    %v138 = vmax.f32 %v137, 0.0
    %v139 = vmin.f32 %v138, 9.0
    %v140 = vmul.f32 %v110, 3.0
    %v141 = vfloor.f32 %v140
    %v142 = vmax.f32 %v141, 0.0
    %v143 = vmin.f32 %v142, 2.0
    %v144 = vld [vmem:[%s4] sm:$0xf]
    %vm145 = vcmp.eq.f32.partialorder %v139, 0.0
    %s146 = sld [smem:[#allocation9]]
    %v147 = vstv %s146
    %v148 = vsel %vm145, %v147, 0.0
    %v149 = vld [vmem:[#allocation11] sm:$0xff]
    %v150 = vsel %vm145, %v111, 0.0
    %v151 = vpack.c.bf16 %v150, %v150
    %vm152 = vcmask 64512
    %v154 = vsel %vm152, %v144, 0
    %vm156 = vcmask 1043456
    %v158 = vsel %vm156, %v151, 0
    %160 = vmatprep.subr.bf16.mxu0 0
    %161 = vmatpush1.bf16.msra.mxu0 %v158
    %162 = vmatprep.subr.bf16.mxu0 0
    %163 = vmatpush1.bf16.msra.mxu0 0
    %164 = vmatprep.subr.bf16.mxu0 0
    %165 = vmatpush1.bf16.msra.mxu0 0
    %166 = vmatprep.subr.bf16.mxu0 0
    %167 = vmatpush1.bf16.msra.mxu0 0
    %168 = vmatprep.subr.bf16.mxu0 0
    %169 = vmatpush1.bf16.msra.mxu0 0
    %170 = vmatprep.subr.bf16.mxu0 0
    %171 = vmatpush1.bf16.msra.mxu0 0
    %172 = vmatprep.subr.bf16.mxu0 0
    %173 = vmatpush1.bf16.msra.mxu0 0
    %174 = vmatprep.subr.bf16.mxu0 0
    %175 = vmatpush1.bf16.msra.mxu0 0
    %176 = vmatprep.subr.bf16.mxu0 0
    %177 = vmatpush1.bf16.msra.mxu0 0
    %178 = vmatprep.subr.bf16.mxu0 0
    %179 = vmatpush1.bf16.msra.mxu0 0
    %180 = vmatprep.subr.bf16.mxu0 0
    %181 = vmatpush1.bf16.msra.mxu0 0
    %182 = vmatprep.subr.bf16.mxu0 0
    %183 = vmatpush1.bf16.msra.mxu0 0
    %184 = vmatprep.subr.bf16.mxu0 0
    %185 = vmatpush1.bf16.msra.mxu0 0
    %186 = vmatprep.subr.bf16.mxu0 0
    %187 = vmatpush1.bf16.msra.mxu0 0
    %188 = vmatprep.subr.bf16.mxu0 0
    %189 = vmatpush1.bf16.msra.mxu0 0
    %190 = vmatprep.subr.bf16.mxu0 0
    %191 = vmatpush1.bf16.msra.mxu0 0
    %192 = vmatprep.mubr.bf16.mxu0 0
    %193 = vmatmul.mubr.bf16.gmra.mrb[0].mxu0 %v154
    %v194 = vpop.f32.mrb[0].mxu0
    %v195 = vadd.f32 0.0, %v194
    %v196 = vpop.f32.mrb[0].mxu0
    %v197 = vpop.f32.mrb[0].mxu0
    %v198 = vpop.f32.mrb[0].mxu0
    %199 = vdwg.mxu0
    %v200 = vadd.f32 %v149, %v195
    %201 = vst [vmem:[#allocation11] sm:$0xff] %v200
    %vm202 = vcmp.eq.f32.partialorder %v139, 1.0
    %s203 = sld [smem:[#allocation9 + $0x1]]
    %v204 = vstv %s203
    %v205 = vsel %vm202, %v204, %v148
    %s206 = scalar_lea.vmem [#allocation11], 8
    %v207 = vld [vmem:[%s206] sm:$0xff]
    %v208 = vsel %vm202, %v111, 0.0
    %v209 = vpack.c.bf16 %v208, %v208
    %v211 = vsel %vm156, %v209, 0
    %213 = vmatprep.subr.bf16.mxu0 0
    %214 = vmatpush1.bf16.msra.mxu0 %v211
    %215 = vmatprep.subr.bf16.mxu0 0
    %216 = vmatpush1.bf16.msra.mxu0 0
    %217 = vmatprep.subr.bf16.mxu0 0
    %218 = vmatpush1.bf16.msra.mxu0 0
    %219 = vmatprep.subr.bf16.mxu0 0
    %220 = vmatpush1.bf16.msra.mxu0 0
    %221 = vmatprep.subr.bf16.mxu0 0
    %222 = vmatpush1.bf16.msra.mxu0 0
    %223 = vmatprep.subr.bf16.mxu0 0
    %224 = vmatpush1.bf16.msra.mxu0 0
    %225 = vmatprep.subr.bf16.mxu0 0
    %226 = vmatpush1.bf16.msra.mxu0 0
    %227 = vmatprep.subr.bf16.mxu0 0
    %228 = vmatpush1.bf16.msra.mxu0 0
    %229 = vmatprep.subr.bf16.mxu0 0
    %230 = vmatpush1.bf16.msra.mxu0 0
    %231 = vmatprep.subr.bf16.mxu0 0
    %232 = vmatpush1.bf16.msra.mxu0 0
    %233 = vmatprep.subr.bf16.mxu0 0
    %234 = vmatpush1.bf16.msra.mxu0 0
    %235 = vmatprep.subr.bf16.mxu0 0
    %236 = vmatpush1.bf16.msra.mxu0 0
    %237 = vmatprep.subr.bf16.mxu0 0
    %238 = vmatpush1.bf16.msra.mxu0 0
    %239 = vmatprep.subr.bf16.mxu0 0
    %240 = vmatpush1.bf16.msra.mxu0 0
    %241 = vmatprep.subr.bf16.mxu0 0
    %242 = vmatpush1.bf16.msra.mxu0 0
    %243 = vmatprep.subr.bf16.mxu0 0
    %244 = vmatpush1.bf16.msra.mxu0 0
    %245 = vmatprep.mubr.bf16.mxu0 0
    %246 = vmatmul.mubr.bf16.gmra.mrb[0].mxu0 %v154
    %v247 = vpop.f32.mrb[0].mxu0
    %v248 = vadd.f32 0.0, %v247
    %v249 = vpop.f32.mrb[0].mxu0
    %v250 = vpop.f32.mrb[0].mxu0
    %v251 = vpop.f32.mrb[0].mxu0
    %252 = vdwg.mxu0
    %v253 = vadd.f32 %v207, %v248
    %254 = vst [vmem:[%s206] sm:$0xff] %v253
    %vm255 = vcmp.eq.f32.partialorder %v139, 2.0
    %s256 = sld [smem:[#allocation9 + $0x2]]
    %v257 = vstv %s256
    %v258 = vsel %vm255, %v257, %v205
    %s259 = scalar_lea.vmem [#allocation11], 16
    %v260 = vld [vmem:[%s259] sm:$0xff]
    %v261 = vsel %vm255, %v111, 0.0
    %v262 = vpack.c.bf16 %v261, %v261
    %v264 = vsel %vm156, %v262, 0
    %266 = vmatprep.subr.bf16.mxu0 0
    %267 = vmatpush1.bf16.msra.mxu0 %v264
    %268 = vmatprep.subr.bf16.mxu0 0
    %269 = vmatpush1.bf16.msra.mxu0 0
    %270 = vmatprep.subr.bf16.mxu0 0
    %271 = vmatpush1.bf16.msra.mxu0 0
    %272 = vmatprep.subr.bf16.mxu0 0
    %273 = vmatpush1.bf16.msra.mxu0 0
    %274 = vmatprep.subr.bf16.mxu0 0
    %275 = vmatpush1.bf16.msra.mxu0 0
    %276 = vmatprep.subr.bf16.mxu0 0
    %277 = vmatpush1.bf16.msra.mxu0 0
    %278 = vmatprep.subr.bf16.mxu0 0
    %279 = vmatpush1.bf16.msra.mxu0 0
    %280 = vmatprep.subr.bf16.mxu0 0
    %281 = vmatpush1.bf16.msra.mxu0 0
    %282 = vmatprep.subr.bf16.mxu0 0
    %283 = vmatpush1.bf16.msra.mxu0 0
    %284 = vmatprep.subr.bf16.mxu0 0
    %285 = vmatpush1.bf16.msra.mxu0 0
    %286 = vmatprep.subr.bf16.mxu0 0
    %287 = vmatpush1.bf16.msra.mxu0 0
    %288 = vmatprep.subr.bf16.mxu0 0
    %289 = vmatpush1.bf16.msra.mxu0 0
    %290 = vmatprep.subr.bf16.mxu0 0
    %291 = vmatpush1.bf16.msra.mxu0 0
    %292 = vmatprep.subr.bf16.mxu0 0
    %293 = vmatpush1.bf16.msra.mxu0 0
    %294 = vmatprep.subr.bf16.mxu0 0
    %295 = vmatpush1.bf16.msra.mxu0 0
    %296 = vmatprep.subr.bf16.mxu0 0
    %297 = vmatpush1.bf16.msra.mxu0 0
    %298 = vmatprep.mubr.bf16.mxu0 0
    %299 = vmatmul.mubr.bf16.gmra.mrb[0].mxu0 %v154
    %v300 = vpop.f32.mrb[0].mxu0
    %v301 = vadd.f32 0.0, %v300
    %v302 = vpop.f32.mrb[0].mxu0
    %v303 = vpop.f32.mrb[0].mxu0
    %v304 = vpop.f32.mrb[0].mxu0
    %305 = vdwg.mxu0
    %v306 = vadd.f32 %v260, %v301
    %307 = vst [vmem:[%s259] sm:$0xff] %v306
    %vm308 = vcmp.eq.f32.partialorder %v139, 3.0
    %s309 = sld [smem:[#allocation9 + $0x3]]
    %v310 = vstv %s309
    %v311 = vsel %vm308, %v310, %v258
    %s312 = scalar_lea.vmem [#allocation11], 24
    %v313 = vld [vmem:[%s312] sm:$0xff]
    %v314 = vsel %vm308, %v111, 0.0
    %v315 = vpack.c.bf16 %v314, %v314
    %v317 = vsel %vm156, %v315, 0
    %319 = vmatprep.subr.bf16.mxu0 0
    %320 = vmatpush1.bf16.msra.mxu0 %v317
    %321 = vmatprep.subr.bf16.mxu0 0
    %322 = vmatpush1.bf16.msra.mxu0 0
    %323 = vmatprep.subr.bf16.mxu0 0
    %324 = vmatpush1.bf16.msra.mxu0 0
    %325 = vmatprep.subr.bf16.mxu0 0
    %326 = vmatpush1.bf16.msra.mxu0 0
    %327 = vmatprep.subr.bf16.mxu0 0
    %328 = vmatpush1.bf16.msra.mxu0 0
    %329 = vmatprep.subr.bf16.mxu0 0
    %330 = vmatpush1.bf16.msra.mxu0 0
    %331 = vmatprep.subr.bf16.mxu0 0
    %332 = vmatpush1.bf16.msra.mxu0 0
    %333 = vmatprep.subr.bf16.mxu0 0
    %334 = vmatpush1.bf16.msra.mxu0 0
    %335 = vmatprep.subr.bf16.mxu0 0
    %336 = vmatpush1.bf16.msra.mxu0 0
    %337 = vmatprep.subr.bf16.mxu0 0
    %338 = vmatpush1.bf16.msra.mxu0 0
    %339 = vmatprep.subr.bf16.mxu0 0
    %340 = vmatpush1.bf16.msra.mxu0 0
    %341 = vmatprep.subr.bf16.mxu0 0
    %342 = vmatpush1.bf16.msra.mxu0 0
    %343 = vmatprep.subr.bf16.mxu0 0
    %344 = vmatpush1.bf16.msra.mxu0 0
    %345 = vmatprep.subr.bf16.mxu0 0
    %346 = vmatpush1.bf16.msra.mxu0 0
    %347 = vmatprep.subr.bf16.mxu0 0
    %348 = vmatpush1.bf16.msra.mxu0 0
    %349 = vmatprep.subr.bf16.mxu0 0
    %350 = vmatpush1.bf16.msra.mxu0 0
    %351 = vmatprep.mubr.bf16.mxu0 0
    %352 = vmatmul.mubr.bf16.gmra.mrb[0].mxu0 %v154
    %v353 = vpop.f32.mrb[0].mxu0
    %v354 = vadd.f32 0.0, %v353
    %v355 = vpop.f32.mrb[0].mxu0
    %v356 = vpop.f32.mrb[0].mxu0
    %v357 = vpop.f32.mrb[0].mxu0
    %358 = vdwg.mxu0
    %v359 = vadd.f32 %v313, %v354
    %360 = vst [vmem:[%s312] sm:$0xff] %v359
    %vm361 = vcmp.eq.f32.partialorder %v139, 4.0
    %s362 = sld [smem:[#allocation9 + $0x4]]
    %v363 = vstv %s362
    %v364 = vsel %vm361, %v363, %v311
    %s365 = scalar_lea.vmem [#allocation11], 32
    %v366 = vld [vmem:[%s365] sm:$0xff]
    %v367 = vsel %vm361, %v111, 0.0
    %v368 = vpack.c.bf16 %v367, %v367
    %v370 = vsel %vm156, %v368, 0
    %372 = vmatprep.subr.bf16.mxu0 0
    %373 = vmatpush1.bf16.msra.mxu0 %v370
    %374 = vmatprep.subr.bf16.mxu0 0
    %375 = vmatpush1.bf16.msra.mxu0 0
    %376 = vmatprep.subr.bf16.mxu0 0
    %377 = vmatpush1.bf16.msra.mxu0 0
    %378 = vmatprep.subr.bf16.mxu0 0
    %379 = vmatpush1.bf16.msra.mxu0 0
    %380 = vmatprep.subr.bf16.mxu0 0
    %381 = vmatpush1.bf16.msra.mxu0 0
    %382 = vmatprep.subr.bf16.mxu0 0
    %383 = vmatpush1.bf16.msra.mxu0 0
    %384 = vmatprep.subr.bf16.mxu0 0
    %385 = vmatpush1.bf16.msra.mxu0 0
    %386 = vmatprep.subr.bf16.mxu0 0
    %387 = vmatpush1.bf16.msra.mxu0 0
    %388 = vmatprep.subr.bf16.mxu0 0
    %389 = vmatpush1.bf16.msra.mxu0 0
    %390 = vmatprep.subr.bf16.mxu0 0
    %391 = vmatpush1.bf16.msra.mxu0 0
    %392 = vmatprep.subr.bf16.mxu0 0
    %393 = vmatpush1.bf16.msra.mxu0 0
    %394 = vmatprep.subr.bf16.mxu0 0
    %395 = vmatpush1.bf16.msra.mxu0 0
    %396 = vmatprep.subr.bf16.mxu0 0
    %397 = vmatpush1.bf16.msra.mxu0 0
    %398 = vmatprep.subr.bf16.mxu0 0
    %399 = vmatpush1.bf16.msra.mxu0 0
    %400 = vmatprep.subr.bf16.mxu0 0
    %401 = vmatpush1.bf16.msra.mxu0 0
    %402 = vmatprep.subr.bf16.mxu0 0
    %403 = vmatpush1.bf16.msra.mxu0 0
    %404 = vmatprep.mubr.bf16.mxu0 0
    %405 = vmatmul.mubr.bf16.gmra.mrb[0].mxu0 %v154
    %v406 = vpop.f32.mrb[0].mxu0
    %v407 = vadd.f32 0.0, %v406
    %v408 = vpop.f32.mrb[0].mxu0
    %v409 = vpop.f32.mrb[0].mxu0
    %v410 = vpop.f32.mrb[0].mxu0
    %411 = vdwg.mxu0
    %v412 = vadd.f32 %v366, %v407
    %413 = vst [vmem:[%s365] sm:$0xff] %v412
    %vm414 = vcmp.eq.f32.partialorder %v139, 5.0
    %s415 = sld [smem:[#allocation9 + $0x5]]
    %v416 = vstv %s415
    %v417 = vsel %vm414, %v416, %v364
    %s418 = scalar_lea.vmem [#allocation11], 40
    %v419 = vld [vmem:[%s418] sm:$0xff]
    %v420 = vsel %vm414, %v111, 0.0
    %v421 = vpack.c.bf16 %v420, %v420
    %v423 = vsel %vm156, %v421, 0
    %425 = vmatprep.subr.bf16.mxu0 0
    %426 = vmatpush1.bf16.msra.mxu0 %v423
    %427 = vmatprep.subr.bf16.mxu0 0
    %428 = vmatpush1.bf16.msra.mxu0 0
    %429 = vmatprep.subr.bf16.mxu0 0
    %430 = vmatpush1.bf16.msra.mxu0 0
    %431 = vmatprep.subr.bf16.mxu0 0
    %432 = vmatpush1.bf16.msra.mxu0 0
    %433 = vmatprep.subr.bf16.mxu0 0
    %434 = vmatpush1.bf16.msra.mxu0 0
    %435 = vmatprep.subr.bf16.mxu0 0
    %436 = vmatpush1.bf16.msra.mxu0 0
    %437 = vmatprep.subr.bf16.mxu0 0
    %438 = vmatpush1.bf16.msra.mxu0 0
    %439 = vmatprep.subr.bf16.mxu0 0
    %440 = vmatpush1.bf16.msra.mxu0 0
    %441 = vmatprep.subr.bf16.mxu0 0
    %442 = vmatpush1.bf16.msra.mxu0 0
    %443 = vmatprep.subr.bf16.mxu0 0
    %444 = vmatpush1.bf16.msra.mxu0 0
    %445 = vmatprep.subr.bf16.mxu0 0
    %446 = vmatpush1.bf16.msra.mxu0 0
    %447 = vmatprep.subr.bf16.mxu0 0
    %448 = vmatpush1.bf16.msra.mxu0 0
    %449 = vmatprep.subr.bf16.mxu0 0
    %450 = vmatpush1.bf16.msra.mxu0 0
    %451 = vmatprep.subr.bf16.mxu0 0
    %452 = vmatpush1.bf16.msra.mxu0 0
    %453 = vmatprep.subr.bf16.mxu0 0
    %454 = vmatpush1.bf16.msra.mxu0 0
    %455 = vmatprep.subr.bf16.mxu0 0
    %456 = vmatpush1.bf16.msra.mxu0 0
    %457 = vmatprep.mubr.bf16.mxu0 0
    %458 = vmatmul.mubr.bf16.gmra.mrb[0].mxu0 %v154
    %v459 = vpop.f32.mrb[0].mxu0
    %v460 = vadd.f32 0.0, %v459
    %v461 = vpop.f32.mrb[0].mxu0
    %v462 = vpop.f32.mrb[0].mxu0
    %v463 = vpop.f32.mrb[0].mxu0
    %464 = vdwg.mxu0
    %v465 = vadd.f32 %v419, %v460
    %466 = vst [vmem:[%s418] sm:$0xff] %v465
    %vm467 = vcmp.eq.f32.partialorder %v139, 6.0
    %s468 = sld [smem:[#allocation9 + $0x6]]
    %v469 = vstv %s468
    %v470 = vsel %vm467, %v469, %v417
    %s471 = scalar_lea.vmem [#allocation11], 48
    %v472 = vld [vmem:[%s471] sm:$0xff]
    %v473 = vsel %vm467, %v111, 0.0
    %v474 = vpack.c.bf16 %v473, %v473
    %v476 = vsel %vm156, %v474, 0
    %478 = vmatprep.subr.bf16.mxu0 0
    %479 = vmatpush1.bf16.msra.mxu0 %v476
    %480 = vmatprep.subr.bf16.mxu0 0
    %481 = vmatpush1.bf16.msra.mxu0 0
    %482 = vmatprep.subr.bf16.mxu0 0
    %483 = vmatpush1.bf16.msra.mxu0 0
    %484 = vmatprep.subr.bf16.mxu0 0
    %485 = vmatpush1.bf16.msra.mxu0 0
    %486 = vmatprep.subr.bf16.mxu0 0
    %487 = vmatpush1.bf16.msra.mxu0 0
    %488 = vmatprep.subr.bf16.mxu0 0
    %489 = vmatpush1.bf16.msra.mxu0 0
    %490 = vmatprep.subr.bf16.mxu0 0
    %491 = vmatpush1.bf16.msra.mxu0 0
    %492 = vmatprep.subr.bf16.mxu0 0
    %493 = vmatpush1.bf16.msra.mxu0 0
    %494 = vmatprep.subr.bf16.mxu0 0
    %495 = vmatpush1.bf16.msra.mxu0 0
    %496 = vmatprep.subr.bf16.mxu0 0
    %497 = vmatpush1.bf16.msra.mxu0 0
    %498 = vmatprep.subr.bf16.mxu0 0
    %499 = vmatpush1.bf16.msra.mxu0 0
    %500 = vmatprep.subr.bf16.mxu0 0
    %501 = vmatpush1.bf16.msra.mxu0 0
    %502 = vmatprep.subr.bf16.mxu0 0
    %503 = vmatpush1.bf16.msra.mxu0 0
    %504 = vmatprep.subr.bf16.mxu0 0
    %505 = vmatpush1.bf16.msra.mxu0 0
    %506 = vmatprep.subr.bf16.mxu0 0
    %507 = vmatpush1.bf16.msra.mxu0 0
    %508 = vmatprep.subr.bf16.mxu0 0
    %509 = vmatpush1.bf16.msra.mxu0 0
    %510 = vmatprep.mubr.bf16.mxu0 0
    %511 = vmatmul.mubr.bf16.gmra.mrb[0].mxu0 %v154
    %v512 = vpop.f32.mrb[0].mxu0
    %v513 = vadd.f32 0.0, %v512
    %v514 = vpop.f32.mrb[0].mxu0
    %v515 = vpop.f32.mrb[0].mxu0
    %v516 = vpop.f32.mrb[0].mxu0
    %517 = vdwg.mxu0
    %v518 = vadd.f32 %v472, %v513
    %519 = vst [vmem:[%s471] sm:$0xff] %v518
    %vm520 = vcmp.eq.f32.partialorder %v139, 7.0
    %s521 = sld [smem:[#allocation9 + $0x7]]
    %v522 = vstv %s521
    %v523 = vsel %vm520, %v522, %v470
    %s524 = scalar_lea.vmem [#allocation11], 56
    %v525 = vld [vmem:[%s524] sm:$0xff]
    %v526 = vsel %vm520, %v111, 0.0
    %v527 = vpack.c.bf16 %v526, %v526
    %v529 = vsel %vm156, %v527, 0
    %531 = vmatprep.subr.bf16.mxu0 0
    %532 = vmatpush1.bf16.msra.mxu0 %v529
    %533 = vmatprep.subr.bf16.mxu0 0
    %534 = vmatpush1.bf16.msra.mxu0 0
    %535 = vmatprep.subr.bf16.mxu0 0
    %536 = vmatpush1.bf16.msra.mxu0 0
    %537 = vmatprep.subr.bf16.mxu0 0
    %538 = vmatpush1.bf16.msra.mxu0 0
    %539 = vmatprep.subr.bf16.mxu0 0
    %540 = vmatpush1.bf16.msra.mxu0 0
    %541 = vmatprep.subr.bf16.mxu0 0
    %542 = vmatpush1.bf16.msra.mxu0 0
    %543 = vmatprep.subr.bf16.mxu0 0
    %544 = vmatpush1.bf16.msra.mxu0 0
    %545 = vmatprep.subr.bf16.mxu0 0
    %546 = vmatpush1.bf16.msra.mxu0 0
    %547 = vmatprep.subr.bf16.mxu0 0
    %548 = vmatpush1.bf16.msra.mxu0 0
    %549 = vmatprep.subr.bf16.mxu0 0
    %550 = vmatpush1.bf16.msra.mxu0 0
    %551 = vmatprep.subr.bf16.mxu0 0
    %552 = vmatpush1.bf16.msra.mxu0 0
    %553 = vmatprep.subr.bf16.mxu0 0
    %554 = vmatpush1.bf16.msra.mxu0 0
    %555 = vmatprep.subr.bf16.mxu0 0
    %556 = vmatpush1.bf16.msra.mxu0 0
    %557 = vmatprep.subr.bf16.mxu0 0
    %558 = vmatpush1.bf16.msra.mxu0 0
    %559 = vmatprep.subr.bf16.mxu0 0
    %560 = vmatpush1.bf16.msra.mxu0 0
    %561 = vmatprep.subr.bf16.mxu0 0
    %562 = vmatpush1.bf16.msra.mxu0 0
    %563 = vmatprep.mubr.bf16.mxu0 0
    %564 = vmatmul.mubr.bf16.gmra.mrb[0].mxu0 %v154
    %v565 = vpop.f32.mrb[0].mxu0
    %v566 = vadd.f32 0.0, %v565
    %v567 = vpop.f32.mrb[0].mxu0
    %v568 = vpop.f32.mrb[0].mxu0
    %v569 = vpop.f32.mrb[0].mxu0
    %570 = vdwg.mxu0
    %v571 = vadd.f32 %v525, %v566
    %572 = vst [vmem:[%s524] sm:$0xff] %v571
    %vm573 = vcmp.eq.f32.partialorder %v139, 8.0
    %s574 = sld [smem:[#allocation9 + $0x8]]
    %v575 = vstv %s574
    %v576 = vsel %vm573, %v575, %v523
    %s577 = scalar_lea.vmem [#allocation11], 64
    %v578 = vld [vmem:[%s577] sm:$0xff]
    %v579 = vsel %vm573, %v111, 0.0
    %v580 = vpack.c.bf16 %v579, %v579
    %v582 = vsel %vm156, %v580, 0
    %584 = vmatprep.subr.bf16.mxu0 0
    %585 = vmatpush1.bf16.msra.mxu0 %v582
    %586 = vmatprep.subr.bf16.mxu0 0
    %587 = vmatpush1.bf16.msra.mxu0 0
    %588 = vmatprep.subr.bf16.mxu0 0
    %589 = vmatpush1.bf16.msra.mxu0 0
    %590 = vmatprep.subr.bf16.mxu0 0
    %591 = vmatpush1.bf16.msra.mxu0 0
    %592 = vmatprep.subr.bf16.mxu0 0
    %593 = vmatpush1.bf16.msra.mxu0 0
    %594 = vmatprep.subr.bf16.mxu0 0
    %595 = vmatpush1.bf16.msra.mxu0 0
    %596 = vmatprep.subr.bf16.mxu0 0
    %597 = vmatpush1.bf16.msra.mxu0 0
    %598 = vmatprep.subr.bf16.mxu0 0
    %599 = vmatpush1.bf16.msra.mxu0 0
    %600 = vmatprep.subr.bf16.mxu0 0
    %601 = vmatpush1.bf16.msra.mxu0 0
    %602 = vmatprep.subr.bf16.mxu0 0
    %603 = vmatpush1.bf16.msra.mxu0 0
    %604 = vmatprep.subr.bf16.mxu0 0
    %605 = vmatpush1.bf16.msra.mxu0 0
    %606 = vmatprep.subr.bf16.mxu0 0
    %607 = vmatpush1.bf16.msra.mxu0 0
    %608 = vmatprep.subr.bf16.mxu0 0
    %609 = vmatpush1.bf16.msra.mxu0 0
    %610 = vmatprep.subr.bf16.mxu0 0
    %611 = vmatpush1.bf16.msra.mxu0 0
    %612 = vmatprep.subr.bf16.mxu0 0
    %613 = vmatpush1.bf16.msra.mxu0 0
    %614 = vmatprep.subr.bf16.mxu0 0
    %615 = vmatpush1.bf16.msra.mxu0 0
    %616 = vmatprep.mubr.bf16.mxu0 0
    %617 = vmatmul.mubr.bf16.gmra.mrb[0].mxu0 %v154
    %v618 = vpop.f32.mrb[0].mxu0
    %v619 = vadd.f32 0.0, %v618
    %v620 = vpop.f32.mrb[0].mxu0
    %v621 = vpop.f32.mrb[0].mxu0
    %v622 = vpop.f32.mrb[0].mxu0
    %623 = vdwg.mxu0
    %v624 = vadd.f32 %v578, %v619
    %625 = vst [vmem:[%s577] sm:$0xff] %v624
    %vm626 = vcmp.eq.f32.partialorder %v139, 9.0
    %s627 = sld [smem:[#allocation9 + $0x9]]
    %v628 = vstv %s627
    %v629 = vsel %vm626, %v628, %v576
    %s630 = scalar_lea.vmem [#allocation11], 72
    %v631 = vld [vmem:[%s630] sm:$0xff]
    %v632 = vsel %vm626, %v111, 0.0
    %v633 = vpack.c.bf16 %v632, %v632
    %v635 = vsel %vm156, %v633, 0
    %637 = vmatprep.subr.bf16.mxu0 0
    %638 = vmatpush1.bf16.msra.mxu0 %v635
    %639 = vmatprep.subr.bf16.mxu0 0
    %640 = vmatpush1.bf16.msra.mxu0 0
    %641 = vmatprep.subr.bf16.mxu0 0
    %642 = vmatpush1.bf16.msra.mxu0 0
    %643 = vmatprep.subr.bf16.mxu0 0
    %644 = vmatpush1.bf16.msra.mxu0 0
    %645 = vmatprep.subr.bf16.mxu0 0
    %646 = vmatpush1.bf16.msra.mxu0 0
    %647 = vmatprep.subr.bf16.mxu0 0
    %648 = vmatpush1.bf16.msra.mxu0 0
    %649 = vmatprep.subr.bf16.mxu0 0
    %650 = vmatpush1.bf16.msra.mxu0 0
    %651 = vmatprep.subr.bf16.mxu0 0
    %652 = vmatpush1.bf16.msra.mxu0 0
    %653 = vmatprep.subr.bf16.mxu0 0
    %654 = vmatpush1.bf16.msra.mxu0 0
    %655 = vmatprep.subr.bf16.mxu0 0
    %656 = vmatpush1.bf16.msra.mxu0 0
    %657 = vmatprep.subr.bf16.mxu0 0
    %658 = vmatpush1.bf16.msra.mxu0 0
    %659 = vmatprep.subr.bf16.mxu0 0
    %660 = vmatpush1.bf16.msra.mxu0 0
    %661 = vmatprep.subr.bf16.mxu0 0
    %662 = vmatpush1.bf16.msra.mxu0 0
    %663 = vmatprep.subr.bf16.mxu0 0
    %664 = vmatpush1.bf16.msra.mxu0 0
    %665 = vmatprep.subr.bf16.mxu0 0
    %666 = vmatpush1.bf16.msra.mxu0 0
    %667 = vmatprep.subr.bf16.mxu0 0
    %668 = vmatpush1.bf16.msra.mxu0 0
    %669 = vmatprep.mubr.bf16.mxu0 0
    %670 = vmatmul.mubr.bf16.gmra.mrb[0].mxu0 %v154
    %v671 = vpop.f32.mrb[0].mxu0
    %v672 = vadd.f32 0.0, %v671
    %v673 = vpop.f32.mrb[0].mxu0
    %v674 = vpop.f32.mrb[0].mxu0
    %v675 = vpop.f32.mrb[0].mxu0
    %676 = vdwg.mxu0
    %v677 = vadd.f32 %v631, %v672
    %678 = vst [vmem:[%s630] sm:$0xff] %v677
    %v679 = vadd.f32 %v629, 0.001
    %v680 = vld [vmem:[%s3] sm:$0x7]
    %vm681 = vcmp.eq.f32.partialorder %v143, 0.0
    %v682 = vlaneseq
    %v683 = vshrl.u32 %v682, 7
    %v684 = vsub.s32 0, %v683
    %v685 = vrot.slane %v680, %v684
    %v686 = vsel %vm681, %v685, 0.0
    %v687 = vld [vmem:[#allocation13] sm:$0xff]
    %v688 = vsel %vm681, %v111, 0.0
    %v689 = vpack.c.bf16 %v688, %v688
    %v691 = vsel %vm156, %v689, 0
    %693 = vmatprep.subr.bf16.mxu0 0
    %694 = vmatpush1.bf16.msra.mxu0 %v691
    %695 = vmatprep.subr.bf16.mxu0 0
    %696 = vmatpush1.bf16.msra.mxu0 0
    %697 = vmatprep.subr.bf16.mxu0 0
    %698 = vmatpush1.bf16.msra.mxu0 0
    %699 = vmatprep.subr.bf16.mxu0 0
    %700 = vmatpush1.bf16.msra.mxu0 0
    %701 = vmatprep.subr.bf16.mxu0 0
    %702 = vmatpush1.bf16.msra.mxu0 0
    %703 = vmatprep.subr.bf16.mxu0 0
    %704 = vmatpush1.bf16.msra.mxu0 0
    %705 = vmatprep.subr.bf16.mxu0 0
    %706 = vmatpush1.bf16.msra.mxu0 0
    %707 = vmatprep.subr.bf16.mxu0 0
    %708 = vmatpush1.bf16.msra.mxu0 0
    %709 = vmatprep.subr.bf16.mxu0 0
    %710 = vmatpush1.bf16.msra.mxu0 0
    %711 = vmatprep.subr.bf16.mxu0 0
    %712 = vmatpush1.bf16.msra.mxu0 0
    %713 = vmatprep.subr.bf16.mxu0 0
    %714 = vmatpush1.bf16.msra.mxu0 0
    %715 = vmatprep.subr.bf16.mxu0 0
    %716 = vmatpush1.bf16.msra.mxu0 0
    %717 = vmatprep.subr.bf16.mxu0 0
    %718 = vmatpush1.bf16.msra.mxu0 0
    %719 = vmatprep.subr.bf16.mxu0 0
    %720 = vmatpush1.bf16.msra.mxu0 0
    %721 = vmatprep.subr.bf16.mxu0 0
    %722 = vmatpush1.bf16.msra.mxu0 0
    %723 = vmatprep.subr.bf16.mxu0 0
    %724 = vmatpush1.bf16.msra.mxu0 0
    %725 = vmatprep.mubr.bf16.mxu0 0
    %726 = vmatmul.mubr.bf16.gmra.mrb[0].mxu0 %v154
    %v727 = vpop.f32.mrb[0].mxu0
    %v728 = vadd.f32 0.0, %v727
    %v729 = vpop.f32.mrb[0].mxu0
    %v730 = vpop.f32.mrb[0].mxu0
    %v731 = vpop.f32.mrb[0].mxu0
    %732 = vdwg.mxu0
    %v733 = vadd.f32 %v687, %v728
    %734 = vst [vmem:[#allocation13] sm:$0xff] %v733
    %vm735 = vcmp.eq.f32.partialorder %v143, 1.0
    %v736 = vlaneseq
    %v737 = vshrl.u32 %v736, 7
    %v738 = vsub.s32 1, %v737
    %v739 = vrot.slane %v680, %v738
    %v740 = vsel %vm735, %v739, %v686
    %s741 = scalar_lea.vmem [#allocation13], 8
    %v742 = vld [vmem:[%s741] sm:$0xff]
    %v743 = vsel %vm735, %v111, 0.0
    %v744 = vpack.c.bf16 %v743, %v743
    %v746 = vsel %vm156, %v744, 0
    %748 = vmatprep.subr.bf16.mxu0 0
    %749 = vmatpush1.bf16.msra.mxu0 %v746
    %750 = vmatprep.subr.bf16.mxu0 0
    %751 = vmatpush1.bf16.msra.mxu0 0
    %752 = vmatprep.subr.bf16.mxu0 0
    %753 = vmatpush1.bf16.msra.mxu0 0
    %754 = vmatprep.subr.bf16.mxu0 0
    %755 = vmatpush1.bf16.msra.mxu0 0
    %756 = vmatprep.subr.bf16.mxu0 0
    %757 = vmatpush1.bf16.msra.mxu0 0
    %758 = vmatprep.subr.bf16.mxu0 0
    %759 = vmatpush1.bf16.msra.mxu0 0
    %760 = vmatprep.subr.bf16.mxu0 0
    %761 = vmatpush1.bf16.msra.mxu0 0
    %762 = vmatprep.subr.bf16.mxu0 0
    %763 = vmatpush1.bf16.msra.mxu0 0
    %764 = vmatprep.subr.bf16.mxu0 0
    %765 = vmatpush1.bf16.msra.mxu0 0
    %766 = vmatprep.subr.bf16.mxu0 0
    %767 = vmatpush1.bf16.msra.mxu0 0
    %768 = vmatprep.subr.bf16.mxu0 0
    %769 = vmatpush1.bf16.msra.mxu0 0
    %770 = vmatprep.subr.bf16.mxu0 0
    %771 = vmatpush1.bf16.msra.mxu0 0
    %772 = vmatprep.subr.bf16.mxu0 0
    %773 = vmatpush1.bf16.msra.mxu0 0
    %774 = vmatprep.subr.bf16.mxu0 0
    %775 = vmatpush1.bf16.msra.mxu0 0
    %776 = vmatprep.subr.bf16.mxu0 0
    %777 = vmatpush1.bf16.msra.mxu0 0
    %778 = vmatprep.subr.bf16.mxu0 0
    %779 = vmatpush1.bf16.msra.mxu0 0
    %780 = vmatprep.mubr.bf16.mxu0 0
    %781 = vmatmul.mubr.bf16.gmra.mrb[0].mxu0 %v154
    %v782 = vpop.f32.mrb[0].mxu0
    %v783 = vadd.f32 0.0, %v782
    %v784 = vpop.f32.mrb[0].mxu0
    %v785 = vpop.f32.mrb[0].mxu0
    %v786 = vpop.f32.mrb[0].mxu0
    %787 = vdwg.mxu0
    %v788 = vadd.f32 %v742, %v783
    %789 = vst [vmem:[%s741] sm:$0xff] %v788
    %vm790 = vcmp.eq.f32.partialorder %v143, 2.0
    %v791 = vlaneseq
    %v792 = vshrl.u32 %v791, 7
    %v793 = vsub.s32 2, %v792
    %v794 = vrot.slane %v680, %v793
    %v795 = vsel %vm790, %v794, %v740
    %s796 = scalar_lea.vmem [#allocation13], 16
    %v797 = vld [vmem:[%s796] sm:$0xff]
    %v798 = vsel %vm790, %v111, 0.0
    %v799 = vpack.c.bf16 %v798, %v798
    %v801 = vsel %vm156, %v799, 0
    %803 = vmatprep.subr.bf16.mxu0 0
    %804 = vmatpush1.bf16.msra.mxu0 %v801
    %805 = vmatprep.subr.bf16.mxu0 0
    %806 = vmatpush1.bf16.msra.mxu0 0
    %807 = vmatprep.subr.bf16.mxu0 0
    %808 = vmatpush1.bf16.msra.mxu0 0
    %809 = vmatprep.subr.bf16.mxu0 0
    %810 = vmatpush1.bf16.msra.mxu0 0
    %811 = vmatprep.subr.bf16.mxu0 0
    %812 = vmatpush1.bf16.msra.mxu0 0
    %813 = vmatprep.subr.bf16.mxu0 0
    %814 = vmatpush1.bf16.msra.mxu0 0
    %815 = vmatprep.subr.bf16.mxu0 0
    %816 = vmatpush1.bf16.msra.mxu0 0
    %817 = vmatprep.subr.bf16.mxu0 0
    %818 = vmatpush1.bf16.msra.mxu0 0
    %819 = vmatprep.subr.bf16.mxu0 0
    %820 = vmatpush1.bf16.msra.mxu0 0
    %821 = vmatprep.subr.bf16.mxu0 0
    %822 = vmatpush1.bf16.msra.mxu0 0
    %823 = vmatprep.subr.bf16.mxu0 0
    %824 = vmatpush1.bf16.msra.mxu0 0
    %825 = vmatprep.subr.bf16.mxu0 0
    %826 = vmatpush1.bf16.msra.mxu0 0
    %827 = vmatprep.subr.bf16.mxu0 0
    %828 = vmatpush1.bf16.msra.mxu0 0
    %829 = vmatprep.subr.bf16.mxu0 0
    %830 = vmatpush1.bf16.msra.mxu0 0
    %831 = vmatprep.subr.bf16.mxu0 0
    %832 = vmatpush1.bf16.msra.mxu0 0
    %833 = vmatprep.subr.bf16.mxu0 0
    %834 = vmatpush1.bf16.msra.mxu0 0
    %835 = vmatprep.mubr.bf16.mxu0 0
    %836 = vmatmul.mubr.bf16.gmra.mrb[0].mxu0 %v154
    %v837 = vpop.f32.mrb[0].mxu0
    %v838 = vadd.f32 0.0, %v837
    %v839 = vpop.f32.mrb[0].mxu0
    %v840 = vpop.f32.mrb[0].mxu0
    %v841 = vpop.f32.mrb[0].mxu0
    %842 = vdwg.mxu0
    %v843 = vadd.f32 %v797, %v838
    %844 = vst [vmem:[%s796] sm:$0xff] %v843
    %v845 = vadd.f32 %v795, 0.001
    %v846 = vmul.f32 %v679, %v845
    %v847 = vrsqrt.pop %v846
    %v848 = vmul.f32 %v846, %v847
    %vm849 = vcmp.eq.f32.partialorder %v846, inf
    %v850 = vsel %vm849, %v846, %v848
    %vm851 = vcmp.eq.f32.partialorder %v846, 0.0
    %v852 = vand.u32 %v846, 2147483648
    %v853 = vsel %vm851, %v852, %v850
    %v854 = vmul.f32 %v130, %v853
    %v855 = vmul.f32 %v854, %v111
    %v856 = vld [vmem:[#allocation10] sm:$0xff]
    %v857 = vadd.f32 %v856, %v855
    %858 = vst [vmem:[#allocation10] sm:$0xff] %v857
    // Predicated region
    $region46: #{tpu_custom_call.1} parent=1 // pred_check
      _
    $region47: #{tpu_custom_call.1} parent=1 // pred_check_branch
      %860 = sbr.rel (0) target = $region49
    $region48: #{tpu_custom_call.1} parent=1 // pred_region
      %s862 = ssub.s32 128, 128
      %863 = vsyncadd [#allocation4], %s862
      %s865 = sshll.u32 [#allocation10], 4
      %s866 = int_to_ptr.vmem [resolvable:$true] %s865
      %868 = dma.vmem_to_hbm [thread:$0]  %s866, 128, %s6, [#allocation4]
    $region49: #{tpu_custom_call.1} parent=1 // pred_fallthru
      _
    // Predicated region
    $region50: #{tpu_custom_call.1} parent=1 // pred_check
      _
    $region51: #{tpu_custom_call.1} parent=1 // pred_check_branch
      %870 = sbr.rel (0) target = $region53
    $region52: #{tpu_custom_call.1} parent=1 // pred_region
      %s872 = ssub.s32 1280, 1280
      %873 = vsyncadd [#allocation12], %s872
      %s874 = sshll.u32 [#allocation11], 4
      %s875 = int_to_ptr.vmem [resolvable:$true] %s874
      %880 = dma.vmem_to_hbm [thread:$0]  %s875, 1280, %s7, [#allocation12], 128, 128, 8
    $region53: #{tpu_custom_call.1} parent=1 // pred_fallthru
      _
    // Predicated region
    $region54: #{tpu_custom_call.1} parent=1 // pred_check
      _
    $region55: #{tpu_custom_call.1} parent=1 // pred_check_branch
      %882 = sbr.rel (0) target = $region57
    $region56: #{tpu_custom_call.1} parent=1 // pred_region
      %s884 = ssub.s32 384, 384
      %885 = vsyncadd [#allocation12], %s884
      %s886 = sshll.u32 [#allocation13], 4
      %s887 = int_to_ptr.vmem [resolvable:$true] %s886
      %892 = dma.vmem_to_hbm [thread:$0]  %s887, 384, %s8, [#allocation12], 128, 128, 8
    $region57: #{tpu_custom_call.1} parent=1 // pred_fallthru
      _
    // Predicated region
    $region58: #{tpu_custom_call.1} parent=1 // pred_check
      _
    $region59: #{tpu_custom_call.1} parent=1 // pred_check_branch
      %894 = sbr.rel (0) target = $region61
    $region60: #{tpu_custom_call.1} parent=1 // pred_region
      %895 = dma.done [#allocation4], 128
    $region61: #{tpu_custom_call.1} parent=1 // pred_fallthru
      _
    // Predicated region
    $region62: #{tpu_custom_call.1} parent=1 // pred_check
      _
    $region63: #{tpu_custom_call.1} parent=1 // pred_check_branch
      %897 = sbr.rel (0) target = $region65
    $region64: #{tpu_custom_call.1} parent=1 // pred_region
      %898 = dma.done [#allocation12], 1280
    $region65: #{tpu_custom_call.1} parent=1 // pred_fallthru
      _
    // Predicated region
    $region66: #{tpu_custom_call.1} parent=1 // pred_check
      _
    $region67: #{tpu_custom_call.1} parent=1 // pred_check_branch
      %900 = sbr.rel (0) target = $region69
    $region68: #{tpu_custom_call.1} parent=1 // pred_region
      %901 = dma.done [#allocation12], 384
    $region69: #{tpu_custom_call.1} parent=1 // pred_fallthru
      _
    %902 = vsyncpa [#allocation3], 1
    %903 = vsyncpa [#allocation7], 1
    %904 = vsyncpa [#allocation4], 1
    %905 = vsyncpa [#allocation12], 1
    %906 = vsyncpa [#allocation5], 1

</llo_original>
